<compile_context>
chip_gen: v5e
topology: v5e:2x2
jax: 0.10.0
libtpu: 0.0.40
codegen_flags: <defaults>
</compile_context>

<pallas_src>
import jax
import jax.numpy as jnp
from jax import lax
from jax.experimental import pallas as pl
from jax.experimental.pallas import tpu as pltpu


# ----------------------------------------------------------------------------
# Generation-aware sizing helpers
# ----------------------------------------------------------------------------
def _vmem_capacity_bytes() -> int:
    try:
        info = pltpu.get_tpu_info()
        for name in ("vmem_capacity_bytes", "vmem_size_bytes", "vmem_bytes"):
            v = getattr(info, name, None)
            if v:
                return int(v)
    except Exception:
        pass
    return 64 * 1024 * 1024        # conservative (v7x-sized) fallback


def _estimate_step_vmem_bytes(TH, W, C, Rp):
    f32, bf16 = 4, 2
    x_blk = 2 * TH * W * C * f32                     # pipelined input block
    halos = 2 * 2 * W * C * f32                      # halo rows (double buffered)
    out_blk = 2 * TH * W * C * f32                   # pipelined output block
    weights = 2 * (9 * C * Rp + Rp * C) * bf16       # double-buffered weights
    xr = (TH + 2) * (W + 2) * C * f32                # padded ReLU slab scratch
    xrb = (TH + 2) * (W + 2) * C * bf16              # hoisted bf16 copy
    col = TH * W * 9 * C * bf16                      # im2col scratch
    interm = TH * W * (Rp * (f32 + bf16) + C * f32)  # h (f32+bf16) and res
    return x_blk + halos + out_blk + weights + xr + xrb + col + interm


def _pick_tile_h(H, W, C, Rp, budget_bytes, B):
    divisors = [d for d in range(1, H + 1) if H % d == 0]
    fitting = [d for d in divisors
               if _estimate_step_vmem_bytes(d, W, C, Rp) <= budget_bytes]
    if not fitting:
        # Best effort: even the smallest divisor is over budget (huge W*C).
        return divisors[0]
    th = max(fitting)
    # Keep at least 2 grid steps so v7x's two TensorCores both get work.
    if B * (H // th) < 2:
        two_plus = [d for d in fitting if H // d >= 2]
        if two_plus:
            th = max(two_plus)
    return th


# ----------------------------------------------------------------------------
# Kernel
# ----------------------------------------------------------------------------
def residual_kernel(x_ref, top_ref, bot_ref, w3_ref, w1_ref, out_ref,
                    xr_ref, col_ref):
    """One (batch, H-tile) grid step.

    x_ref  : (1, TH, W, C) f32   pre-ReLU input tile (also the residual term)
    top_ref: (1, 1, W, C)  f32   row above the tile (zeros for the first tile)
    bot_ref: (1, 1, W, C)  f32   row below the tile (zeros for the last tile)
    w3_ref : (9*C, Rp)     bf16  3x3 weights, (dh, dw, cin)-major rows, R padded
    w1_ref : (Rp, C)       bf16  1x1 weights (padded rows are zero)
    out_ref: (1, TH, W, C)       y = x + res
    xr_ref : (TH+2, W+2, C) f32  ReLU'd, zero-padded slab (scratch)
    col_ref: (TH*W, 9*C)   bf16  im2col scratch
    """
    TH, W, C = x_ref.shape[1], x_ref.shape[2], x_ref.shape[3]

    # Hoisted ReLU: one pass over the haloed slab.  Zero padding commutes with
    # ReLU, so padding the post-ReLU activations is equivalent to the module.
    slab = jnp.concatenate([top_ref[0], x_ref[0], bot_ref[0]], axis=0)
    xr_ref[:, 1:W + 1, :] = jnp.maximum(slab, 0.0)
    zcol = jnp.zeros((TH + 2, 1, C), jnp.float32)
    xr_ref[:, 0:1, :] = zcol                  # left zero-pad column
    xr_ref[:, W + 1:W + 2, :] = zcol          # right zero-pad column
    # (Re-written every step -> no cross-step scratch state; both grid axes
    #  stay 'parallel' / megacore-safe.)

    # Hoisted bf16 cast (once, not 9x); the tap loop below only slices+stores.
    xrb = xr_ref[...].astype(jnp.bfloat16)

    # im2col: the 9 shifted views packed into one (TH*W, 9*C) operand so the
    # whole 3x3 conv is a single MXU matmul with K = 9*C.
    for dh in range(3):
        for dw in range(3):
            k = dh * 3 + dw
            col_ref[:, k * C:(k + 1) * C] = (
                xrb[dh:dh + TH, dw:dw + W, :].reshape(TH * W, C))

    # conv3x3 (+ ReLU) then conv1x1 -- bf16 MXU matmuls, f32 accumulation.
    h = jnp.dot(col_ref[...], w3_ref[...],
                preferred_element_type=jnp.float32)            # (TH*W, Rp)
    h = jnp.maximum(h, 0.0).astype(jnp.bfloat16)               # lane-dense
    res = jnp.dot(h, w1_ref[...],
                  preferred_element_type=jnp.float32)          # (TH*W, C)

    # Residual add uses the pre-ReLU center pixels, kept in f32.
    x_center = x_ref[0].reshape(TH * W, C)
    out_ref[...] = (x_center + res).reshape(1, TH, W, C).astype(out_ref.dtype)


# ----------------------------------------------------------------------------
# Wrappers
# ----------------------------------------------------------------------------
def residual_layer_nhwc(x, w3, w1, *, tile_h=None):
    """x: (B, H, W, Cin); w3: (3, 3, Cin, R) HWIO; w1: (R, Cout). -> (B, H, W, Cout)."""
    B, H, W, C = x.shape
    assert w3.shape[0] == 3 and w3.shape[1] == 3 and w3.shape[2] == C
    R = w3.shape[3]
    Cout = w1.shape[1]
    assert w1.shape[0] == R and Cout == C, "residual add requires h_dim == in_dim"

    Rp = max(128, ((R + 127) // 128) * 128)          # lane-dense hidden width

    cap = _vmem_capacity_bytes()
    vmem_limit = max(32 * 1024 * 1024, (cap * 3) // 4)   # ~48 MiB v7x, ~96 MiB v5e/v6e
    budget = vmem_limit // 2                             # headroom for compiler/spills

    if tile_h is not None and H % tile_h == 0:
        TH = tile_h
    else:
        TH = _pick_tile_h(H, W, C, Rp, budget, B)
    nT = H // TH

    # MXU-ready weights: (dh, dw, cin)-major rows, bf16, hidden dim zero-padded.
    w3_flat = w3.reshape(9 * C, R).astype(jnp.bfloat16)
    w3_p = jnp.zeros((9 * C, Rp), jnp.bfloat16).at[:, :R].set(w3_flat)
    w1_p = jnp.zeros((Rp, C), jnp.bfloat16).at[:R, :].set(w1.astype(jnp.bfloat16))

    # Tiny halo-row side inputs (2 rows per tile, ~2/TH of the input) instead of
    # a full padded+gathered copy of x; the main tile is read straight from x.
    zrow = jnp.zeros((B, 1, W, C), x.dtype)
    if nT > 1:
        top_rows = x[:, TH - 1:(nT - 1) * TH:TH, :, :]      # rows t*TH-1, t=1..nT-1
        bot_rows = x[:, TH:(nT - 1) * TH + 1:TH, :, :]      # rows (t+1)*TH, t=0..nT-2
        top = jnp.concatenate([zrow, top_rows], axis=1)     # (B, nT, W, C)
        bot = jnp.concatenate([bot_rows, zrow], axis=1)     # (B, nT, W, C)
    else:
        top = zrow
        bot = zrow

    out = pl.pallas_call(
        residual_kernel,
        out_shape=jax.ShapeDtypeStruct((B, H, W, Cout), x.dtype),
        grid_spec=pltpu.PrefetchScalarGridSpec(
            num_scalar_prefetch=0,
            grid=(B, nT),
            in_specs=[
                pl.BlockSpec((1, TH, W, C), lambda b, t: (b, t, 0, 0)),   # x tile
                pl.BlockSpec((1, 1, W, C), lambda b, t: (b, t, 0, 0)),    # top halo
                pl.BlockSpec((1, 1, W, C), lambda b, t: (b, t, 0, 0)),    # bottom halo
                pl.BlockSpec((9 * C, Rp), lambda b, t: (0, 0)),           # w3
                pl.BlockSpec((Rp, Cout), lambda b, t: (0, 0)),            # w1
            ],
            out_specs=pl.BlockSpec((1, TH, W, Cout), lambda b, t: (b, t, 0, 0)),
            scratch_shapes=[
                pltpu.VMEM((TH + 2, W + 2, C), jnp.float32),   # padded ReLU slab
                pltpu.VMEM((TH * W, 9 * C), jnp.bfloat16),     # im2col
            ],
        ),
        compiler_params=pltpu.CompilerParams(
            dimension_semantics=("parallel", "parallel"),
            vmem_limit_bytes=int(vmem_limit)),
    )(x, top, bot, w3_p, w1_p)
    return out


def residual_layer_nchw(x_nchw, w3, w1, *, tile_h=None):
    """Matches PyTorch ResidualLayer.forward on NCHW input.

    If the surrounding model is NHWC end-to-end, call residual_layer_nhwc
    directly and skip these two transposes (saves two full HBM passes).
    """
    x_nhwc = jnp.transpose(x_nchw, (0, 2, 3, 1))
    y_nhwc = residual_layer_nhwc(x_nhwc, w3, w1, tile_h=tile_h)
    return jnp.transpose(y_nhwc, (0, 3, 1, 2))


# ----------------------------------------------------------------------------
# Reference + demo
# ----------------------------------------------------------------------------
def _reference_nhwc(x_nhwc, w3, w1, emulate_bf16=False):
    """Pure-JAX reference (lax.conv).  emulate_bf16 rounds the matmul operands
    to bf16 (what the MXU path does) so the comparison isolates structure."""
    def cast(a):
        return a.astype(jnp.bfloat16).astype(jnp.float32) if emulate_bf16 else a

    h = jnp.maximum(x_nhwc, 0.0)
    h = lax.conv_general_dilated(
        cast(h), cast(w3), window_strides=(1, 1), padding="SAME",
        dimension_numbers=("NHWC", "HWIO", "NHWC"),
        precision=lax.Precision.HIGHEST)
    h = jnp.maximum(h, 0.0)
    h = lax.conv_general_dilated(
        cast(h), cast(w1)[None, None, :, :], window_strides=(1, 1),
        padding="VALID", dimension_numbers=("NHWC", "HWIO", "NHWC"),
        precision=lax.Precision.HIGHEST)
    return x_nhwc + h


if __name__ == "__main__":
    # Small shapes consistent with the module: in_dim == h_dim (residual add).
    B, Cin, H, W = 2, 4, 16, 16        # x: (2, 4, 16, 16) NCHW
    res_h_dim = 8                      # hidden channels of the 3x3 conv
    h_dim = Cin                        # output channels of the 1x1 conv

    key = jax.random.PRNGKey(0)
    kx, k3, k1 = jax.random.split(key, 3)

    x = jax.random.normal(kx, (B, Cin, H, W), dtype=jnp.float32)
    w3 = 0.1 * jax.random.normal(k3, (3, 3, Cin, res_h_dim), dtype=jnp.float32)
    w1 = 0.1 * jax.random.normal(k1, (res_h_dim, h_dim), dtype=jnp.float32)

    x_nhwc = jnp.transpose(x, (0, 2, 3, 1))
    y_ref_bf16 = _reference_nhwc(x_nhwc, w3, w1, emulate_bf16=True)
    y_ref_f32 = _reference_nhwc(x_nhwc, w3, w1, emulate_bf16=False)

    # Auto tile (single tile here) and a forced 2-tile run that exercises the
    # halo-row path.
    for th in (None, 8):
        y = residual_layer_nchw(x, w3, w1, tile_h=th)
        y = jax.block_until_ready(y)
        assert y.shape == (B, h_dim, H, W)
        y_nhwc = jnp.transpose(y, (0, 2, 3, 1))
        err = float(jnp.max(jnp.abs(y_nhwc - y_ref_bf16)))
        # Strict check against a reference that emulates the bf16 operand rounding.
        assert jnp.allclose(y_nhwc, y_ref_bf16, atol=5e-3, rtol=5e-3), err
        # Loose sanity check against the pure-f32 module semantics.
        assert jnp.allclose(y_nhwc, y_ref_f32, atol=1e-1, rtol=1e-1)

    print("KERNEL_OK")
</pallas_src>

<mosaic_0001>
module attributes {stable_mosaic.version = 11 : i64} {
  func.func @residual_kernel(%arg0: i32, %arg1: i32, %arg2: memref<1x16x16x4xf32, #tpu.memory_space<vmem>>, %arg3: memref<1x1x16x4xf32, #tpu.memory_space<vmem>>, %arg4: memref<1x1x16x4xf32, #tpu.memory_space<vmem>>, %arg5: memref<36x128xbf16, #tpu.memory_space<vmem>>, %arg6: memref<128x4xbf16, #tpu.memory_space<vmem>>, %arg7: memref<1x16x16x4xf32, #tpu.memory_space<vmem>>, %arg8: memref<18x18x4xf32, #tpu.memory_space<vmem>>, %arg9: memref<256x36xbf16, #tpu.memory_space<vmem>>) attributes {dimension_semantics = [#tpu.dimension_semantics<parallel>, #tpu.dimension_semantics<parallel>], iteration_bounds = array<i64: 2, 1>, scalar_prefetch = 0 : i64, scratch_operands = 2 : i64, tpu.core_type = #tpu.core_type<tc>, window_params = [{transform_indices = @transform_0, window_bounds = array<i64: 1, 16, 16, 4>}, {transform_indices = @transform_1, window_bounds = array<i64: 1, 1, 16, 4>}, {transform_indices = @transform_2, window_bounds = array<i64: 1, 1, 16, 4>}, {pipeline_mode = #tpu.pipeline_mode<synchronous>, transform_indices = @transform_3, window_bounds = array<i64: 36, 128>}, {pipeline_mode = #tpu.pipeline_mode<synchronous>, transform_indices = @transform_4, window_bounds = array<i64: 128, 4>}, {transform_indices = @transform_5, window_bounds = array<i64: 1, 16, 16, 4>}]} {
    %c0 = arith.constant 0 : index
    %c0_0 = arith.constant 0 : index
    %c0_1 = arith.constant 0 : index
    %c0_2 = arith.constant 0 : index
    %0 = vector.load %arg3[%c0, %c0_0, %c0_1, %c0_2] : memref<1x1x16x4xf32, #tpu.memory_space<vmem>>, vector<1x1x16x4xf32>
    %1 = vector.shape_cast %0 : vector<1x1x16x4xf32> to vector<1x16x4xf32>
    %c0_3 = arith.constant 0 : index
    %c0_4 = arith.constant 0 : index
    %c0_5 = arith.constant 0 : index
    %c0_6 = arith.constant 0 : index
    %2 = vector.load %arg2[%c0_3, %c0_4, %c0_5, %c0_6] : memref<1x16x16x4xf32, #tpu.memory_space<vmem>>, vector<1x16x16x4xf32>
    %3 = vector.shape_cast %2 : vector<1x16x16x4xf32> to vector<16x16x4xf32>
    %c0_7 = arith.constant 0 : index
    %c0_8 = arith.constant 0 : index
    %c0_9 = arith.constant 0 : index
    %c0_10 = arith.constant 0 : index
    %4 = vector.load %arg4[%c0_7, %c0_8, %c0_9, %c0_10] : memref<1x1x16x4xf32, #tpu.memory_space<vmem>>, vector<1x1x16x4xf32>
    %5 = vector.shape_cast %4 : vector<1x1x16x4xf32> to vector<1x16x4xf32>
    %6 = tpu.concatenate %1, %3, %5 in 0 : vector<1x16x4xf32>, vector<16x16x4xf32>, vector<1x16x4xf32> -> vector<18x16x4xf32>
    %cst = arith.constant 0.000000e+00 : f32
    %7 = vector.broadcast %cst : f32 to vector<18x16x4xf32>
    %8 = arith.maximumf %6, %7 : vector<18x16x4xf32>
    %c0_11 = arith.constant 0 : index
    %c1 = arith.constant 1 : index
    %c0_12 = arith.constant 0 : index
    %9 = vector.load %arg8[%c0_11, %c1, %c0_12] : memref<18x18x4xf32, #tpu.memory_space<vmem>>, vector<18x16x4xf32>
    tpu.vector_store %arg8[%c0_11, %c1, %c0_12], %8 {strides = array<i32>} : memref<18x18x4xf32, #tpu.memory_space<vmem>>, vector<18x16x4xf32>,
    %cst_13 = arith.constant 0.000000e+00 : f32
    %10 = vector.broadcast %cst_13 : f32 to vector<18x1x4xf32>
    %c0_14 = arith.constant 0 : index
    %c0_15 = arith.constant 0 : index
    %c0_16 = arith.constant 0 : index
    %11 = vector.load %arg8[%c0_14, %c0_15, %c0_16] : memref<18x18x4xf32, #tpu.memory_space<vmem>>, vector<18x1x4xf32>
    tpu.vector_store %arg8[%c0_14, %c0_15, %c0_16], %10 {strides = array<i32>} : memref<18x18x4xf32, #tpu.memory_space<vmem>>, vector<18x1x4xf32>,
    %c0_17 = arith.constant 0 : index
    %c17 = arith.constant 17 : index
    %c0_18 = arith.constant 0 : index
    %12 = vector.load %arg8[%c0_17, %c17, %c0_18] : memref<18x18x4xf32, #tpu.memory_space<vmem>>, vector<18x1x4xf32>
    tpu.vector_store %arg8[%c0_17, %c17, %c0_18], %10 {strides = array<i32>} : memref<18x18x4xf32, #tpu.memory_space<vmem>>, vector<18x1x4xf32>,
    %c0_19 = arith.constant 0 : index
    %c0_20 = arith.constant 0 : index
    %c0_21 = arith.constant 0 : index
    %13 = vector.load %arg8[%c0_19, %c0_20, %c0_21] : memref<18x18x4xf32, #tpu.memory_space<vmem>>, vector<18x18x4xf32>
    %14 = arith.truncf %13 : vector<18x18x4xf32> to vector<18x18x4xbf16>
    %15 = vector.extract_strided_slice %14 {offsets = [0, 0, 0], sizes = [16, 16, 4], strides = [1, 1, 1]} : vector<18x18x4xbf16> to vector<16x16x4xbf16>
    %16 = vector.shape_cast %15 : vector<16x16x4xbf16> to vector<256x4xbf16>
    %c0_22 = arith.constant 0 : index
    %c0_23 = arith.constant 0 : index
    %17 = vector.load %arg9[%c0_22, %c0_23] : memref<256x36xbf16, #tpu.memory_space<vmem>>, vector<256x4xbf16>
    tpu.vector_store %arg9[%c0_22, %c0_23], %16 {strides = array<i32>} : memref<256x36xbf16, #tpu.memory_space<vmem>>, vector<256x4xbf16>,
    %18 = vector.extract_strided_slice %14 {offsets = [0, 1, 0], sizes = [16, 16, 4], strides = [1, 1, 1]} : vector<18x18x4xbf16> to vector<16x16x4xbf16>
    %19 = vector.shape_cast %18 : vector<16x16x4xbf16> to vector<256x4xbf16>
    %c0_24 = arith.constant 0 : index
    %c4 = arith.constant 4 : index
    %20 = vector.load %arg9[%c0_24, %c4] : memref<256x36xbf16, #tpu.memory_space<vmem>>, vector<256x4xbf16>
    tpu.vector_store %arg9[%c0_24, %c4], %19 {strides = array<i32>} : memref<256x36xbf16, #tpu.memory_space<vmem>>, vector<256x4xbf16>,
    %21 = vector.extract_strided_slice %14 {offsets = [0, 2, 0], sizes = [16, 16, 4], strides = [1, 1, 1]} : vector<18x18x4xbf16> to vector<16x16x4xbf16>
    %22 = vector.shape_cast %21 : vector<16x16x4xbf16> to vector<256x4xbf16>
    %c0_25 = arith.constant 0 : index
    %c8 = arith.constant 8 : index
    %23 = vector.load %arg9[%c0_25, %c8] : memref<256x36xbf16, #tpu.memory_space<vmem>>, vector<256x4xbf16>
    tpu.vector_store %arg9[%c0_25, %c8], %22 {strides = array<i32>} : memref<256x36xbf16, #tpu.memory_space<vmem>>, vector<256x4xbf16>,
    %24 = vector.extract_strided_slice %14 {offsets = [1, 0, 0], sizes = [16, 16, 4], strides = [1, 1, 1]} : vector<18x18x4xbf16> to vector<16x16x4xbf16>
    %25 = vector.shape_cast %24 : vector<16x16x4xbf16> to vector<256x4xbf16>
    %c0_26 = arith.constant 0 : index
    %c12 = arith.constant 12 : index
    %26 = vector.load %arg9[%c0_26, %c12] : memref<256x36xbf16, #tpu.memory_space<vmem>>, vector<256x4xbf16>
    tpu.vector_store %arg9[%c0_26, %c12], %25 {strides = array<i32>} : memref<256x36xbf16, #tpu.memory_space<vmem>>, vector<256x4xbf16>,
    %27 = vector.extract_strided_slice %14 {offsets = [1, 1, 0], sizes = [16, 16, 4], strides = [1, 1, 1]} : vector<18x18x4xbf16> to vector<16x16x4xbf16>
    %28 = vector.shape_cast %27 : vector<16x16x4xbf16> to vector<256x4xbf16>
    %c0_27 = arith.constant 0 : index
    %c16 = arith.constant 16 : index
    %29 = vector.load %arg9[%c0_27, %c16] : memref<256x36xbf16, #tpu.memory_space<vmem>>, vector<256x4xbf16>
    tpu.vector_store %arg9[%c0_27, %c16], %28 {strides = array<i32>} : memref<256x36xbf16, #tpu.memory_space<vmem>>, vector<256x4xbf16>,
    %30 = vector.extract_strided_slice %14 {offsets = [1, 2, 0], sizes = [16, 16, 4], strides = [1, 1, 1]} : vector<18x18x4xbf16> to vector<16x16x4xbf16>
    %31 = vector.shape_cast %30 : vector<16x16x4xbf16> to vector<256x4xbf16>
    %c0_28 = arith.constant 0 : index
    %c20 = arith.constant 20 : index
    %32 = vector.load %arg9[%c0_28, %c20] : memref<256x36xbf16, #tpu.memory_space<vmem>>, vector<256x4xbf16>
    tpu.vector_store %arg9[%c0_28, %c20], %31 {strides = array<i32>} : memref<256x36xbf16, #tpu.memory_space<vmem>>, vector<256x4xbf16>,
    %33 = vector.extract_strided_slice %14 {offsets = [2, 0, 0], sizes = [16, 16, 4], strides = [1, 1, 1]} : vector<18x18x4xbf16> to vector<16x16x4xbf16>
    %34 = vector.shape_cast %33 : vector<16x16x4xbf16> to vector<256x4xbf16>
    %c0_29 = arith.constant 0 : index
    %c24 = arith.constant 24 : index
    %35 = vector.load %arg9[%c0_29, %c24] : memref<256x36xbf16, #tpu.memory_space<vmem>>, vector<256x4xbf16>
    tpu.vector_store %arg9[%c0_29, %c24], %34 {strides = array<i32>} : memref<256x36xbf16, #tpu.memory_space<vmem>>, vector<256x4xbf16>,
    %36 = vector.extract_strided_slice %14 {offsets = [2, 1, 0], sizes = [16, 16, 4], strides = [1, 1, 1]} : vector<18x18x4xbf16> to vector<16x16x4xbf16>
    %37 = vector.shape_cast %36 : vector<16x16x4xbf16> to vector<256x4xbf16>
    %c0_30 = arith.constant 0 : index
    %c28 = arith.constant 28 : index
    %38 = vector.load %arg9[%c0_30, %c28] : memref<256x36xbf16, #tpu.memory_space<vmem>>, vector<256x4xbf16>
    tpu.vector_store %arg9[%c0_30, %c28], %37 {strides = array<i32>} : memref<256x36xbf16, #tpu.memory_space<vmem>>, vector<256x4xbf16>,
    %39 = vector.extract_strided_slice %14 {offsets = [2, 2, 0], sizes = [16, 16, 4], strides = [1, 1, 1]} : vector<18x18x4xbf16> to vector<16x16x4xbf16>
    %40 = vector.shape_cast %39 : vector<16x16x4xbf16> to vector<256x4xbf16>
    %c0_31 = arith.constant 0 : index
    %c32 = arith.constant 32 : index
    %41 = vector.load %arg9[%c0_31, %c32] : memref<256x36xbf16, #tpu.memory_space<vmem>>, vector<256x4xbf16>
    tpu.vector_store %arg9[%c0_31, %c32], %40 {strides = array<i32>} : memref<256x36xbf16, #tpu.memory_space<vmem>>, vector<256x4xbf16>,
    %c0_32 = arith.constant 0 : index
    %c0_33 = arith.constant 0 : index
    %42 = vector.load %arg9[%c0_32, %c0_33] : memref<256x36xbf16, #tpu.memory_space<vmem>>, vector<256x36xbf16>
    %c0_34 = arith.constant 0 : index
    %c0_35 = arith.constant 0 : index
    %43 = vector.load %arg5[%c0_34, %c0_35] : memref<36x128xbf16, #tpu.memory_space<vmem>>, vector<36x128xbf16>
    %cst_36 = arith.constant dense<0.000000e+00> : vector<256x128xf32>
    %44 = tpu.matmul %42, %43, %cst_36 {dimension_numbers = #tpu.dot_dimension_numbers<[1], [0], [0], [1], [0, 0, 1, 1], [], []>} : vector<256x36xbf16>, vector<36x128xbf16>, vector<256x128xf32> -> vector<256x128xf32>
    %cst_37 = arith.constant 0.000000e+00 : f32
    %45 = vector.broadcast %cst_37 : f32 to vector<256x128xf32>
    %46 = arith.maximumf %44, %45 : vector<256x128xf32>
    %47 = arith.truncf %46 : vector<256x128xf32> to vector<256x128xbf16>
    %c0_38 = arith.constant 0 : index
    %c0_39 = arith.constant 0 : index
    %48 = vector.load %arg6[%c0_38, %c0_39] : memref<128x4xbf16, #tpu.memory_space<vmem>>, vector<128x4xbf16>
    %cst_40 = arith.constant dense<0.000000e+00> : vector<256x4xf32>
    %49 = tpu.matmul %47, %48, %cst_40 {dimension_numbers = #tpu.dot_dimension_numbers<[1], [0], [0], [1], [0, 0, 1, 1], [], []>} : vector<256x128xbf16>, vector<128x4xbf16>, vector<256x4xf32> -> vector<256x4xf32>
    %c0_41 = arith.constant 0 : index
    %c0_42 = arith.constant 0 : index
    %c0_43 = arith.constant 0 : index
    %c0_44 = arith.constant 0 : index
    %50 = vector.load %arg2[%c0_41, %c0_42, %c0_43, %c0_44] : memref<1x16x16x4xf32, #tpu.memory_space<vmem>>, vector<1x16x16x4xf32>
    %51 = vector.shape_cast %50 : vector<1x16x16x4xf32> to vector<16x16x4xf32>
    %52 = vector.shape_cast %51 : vector<16x16x4xf32> to vector<256x4xf32>
    %53 = arith.addf %52, %49 : vector<256x4xf32>
    %54 = vector.shape_cast %53 : vector<256x4xf32> to vector<1x16x16x4xf32>
    %c0_45 = arith.constant 0 : index
    %c0_46 = arith.constant 0 : index
    %c0_47 = arith.constant 0 : index
    %c0_48 = arith.constant 0 : index
    %55 = vector.load %arg7[%c0_45, %c0_46, %c0_47, %c0_48] : memref<1x16x16x4xf32, #tpu.memory_space<vmem>>, vector<1x16x16x4xf32>
    tpu.vector_store %arg7[%c0_45, %c0_46, %c0_47, %c0_48], %54 {strides = array<i32>} : memref<1x16x16x4xf32, #tpu.memory_space<vmem>>, vector<1x16x16x4xf32>,
    return
  }
  func.func @transform_0(%arg0: i32, %arg1: i32) -> (i32, i32, i32, i32) {
    %c0_i32 = arith.constant 0 : i32
    %c0_i32_0 = arith.constant 0 : i32
    %c0_i32_1 = arith.constant 0 : i32
    return %arg0, %arg1, %c0_i32, %c0_i32_0 : i32, i32, i32, i32
  }
  func.func @transform_1(%arg0: i32, %arg1: i32) -> (i32, i32, i32, i32) {
    %c0_i32 = arith.constant 0 : i32
    %c0_i32_0 = arith.constant 0 : i32
    %c0_i32_1 = arith.constant 0 : i32
    return %arg0, %arg1, %c0_i32, %c0_i32_0 : i32, i32, i32, i32
  }
  func.func @transform_2(%arg0: i32, %arg1: i32) -> (i32, i32, i32, i32) {
    %c0_i32 = arith.constant 0 : i32
    %c0_i32_0 = arith.constant 0 : i32
    %c0_i32_1 = arith.constant 0 : i32
    return %arg0, %arg1, %c0_i32, %c0_i32_0 : i32, i32, i32, i32
  }
  func.func @transform_3(%arg0: i32, %arg1: i32) -> (i32, i32) {
    %c0_i32 = arith.constant 0 : i32
    %c0_i32_0 = arith.constant 0 : i32
    %c0_i32_1 = arith.constant 0 : i32
    return %c0_i32, %c0_i32_0 : i32, i32
  }
  func.func @transform_4(%arg0: i32, %arg1: i32) -> (i32, i32) {
    %c0_i32 = arith.constant 0 : i32
    %c0_i32_0 = arith.constant 0 : i32
    %c0_i32_1 = arith.constant 0 : i32
    return %c0_i32, %c0_i32_0 : i32, i32
  }
  func.func @transform_5(%arg0: i32, %arg1: i32) -> (i32, i32, i32, i32) {
    %c0_i32 = arith.constant 0 : i32
    %c0_i32_0 = arith.constant 0 : i32
    %c0_i32_1 = arith.constant 0 : i32
    return %arg0, %arg1, %c0_i32, %c0_i32_0 : i32, i32, i32, i32
  }
}

</mosaic_0001>

<llo_original>
// kernel: tpu_custom_call.1
$region0: #{tpu_custom_call.1}
  #allocation0 [shape = 'u32[]', space=smem, size = 0x4, offset = 0x4, fixed_abs, tag = 'smem constant byte address 0x4 - core index']
  #allocation1 [shape = 'u32[72,128]{1,0:T(1,128)}', space=vmem, size = 0x9000, scoped, tag = 'internal scratch']
  #allocation2 [shape = 'f32[18,18,4]{2,1,0:T(8,128)}', space=vmem, size = 0x36000, scoped, tag = 'scratch operand']
  #allocation3 [shape = 'bf16[256,36]{1,0:T(8,128)(2,1)}', space=vmem, size = 0x10000, scoped, tag = 'scratch operand']
  %s0 = inlined_call_operand.vmem [shape: f32[2,16,16,4], index: 0, kind: input, shape index: {}]
  %s1 = inlined_call_operand.vmem [shape: f32[2,1,16,4], index: 1, kind: input, shape index: {}]
  %s2 = inlined_call_operand.vmem [shape: f32[2,1,16,4], index: 2, kind: input, shape index: {}]
  %s3 = inlined_call_operand.vmem [shape: bf16[36,128], index: 3, kind: input, shape index: {}]
  %s4 = inlined_call_operand.vmem [shape: bf16[128,4], index: 4, kind: input, shape index: {}]
  %s5 = inlined_call_operand.vmem [shape: f32[2,16,16,4], index: 5, kind: output, shape index: {}]
  %s6 = sld [smem:[#allocation0]]
  $region53: #{tpu_custom_call.1} parent=0
    _
  %s8 = ssub.s32 1, %s6
  %s9 = scalar_select 0, %s8, %s6
  loop: start=0, step=1, limit=4
  $region2: #{tpu_custom_call.1} parent=0 // loop_pre_header
    _
  $region3: #{tpu_custom_call.1} parent=0 // loop_header
    %s11 = sphi 0, %s15
    %p12 = scmp.ge.s32.totalorder %s11, 4
    %s18 = sphi 0, %s30
    %s19 = sphi 0, %s26
    %s20 = sphi 0, %s18
    %s21 = sphi 0, %s19
    %s22 = sphi 0, %s20
    %s23 = sphi 0, %s21
    %s35 = sphi 0, %s37
    %s38 = sphi 0, %s35
    %s39 = sphi 0, %s38
    %s55 = sphi 0, %s39
    %s63 = sphi 0, %s65
    %s66 = sphi 0, %s63
    %s67 = sphi 0, %s66
    %s83 = sphi 0, %s67
    %s91 = sphi 0, %s93
    %s94 = sphi 0, %s91
    %s95 = sphi 0, %s94
    %s111 = sphi 0, %s95
    %s115 = sphi 0, %s115
    %s117 = sphi 0, %s115
    %s118 = sphi 0, %s117
    %s132 = sphi 0, %s118
    %s136 = sphi 0, %s136
    %s138 = sphi 0, %s136
    %s139 = sphi 0, %s138
    %s153 = sphi 0, %s139
    %s161 = sphi 0, %s163
    %s164 = sphi 0, %s161
    %s165 = sphi 0, %s164
    %s181 = sphi 0, %s165
  $region4: #{tpu_custom_call.1} parent=0 // loop_header_branch
    %14 = sbr.rel (%p12) target = $region8
  $region5: #{tpu_custom_call.1} parent=0 // loop_body
    %s16 = ssub.s32 %s11, 1
    %s17 = ssub.s32 %s11, 2
    %s24 = sadd.s32 1, %s19
    %p25 = scmp.ge.s32.totalorder %s24, 1
    %s26 = scalar_select %p25, 0, %s24
    %s27 = sadd.s32 1, %s18
    %s28 = scalar_select %p25, %s27, %s18
    %p29 = scmp.ge.s32.totalorder %s28, 2
    %s30 = scalar_select %p29, 0, %s28
    %s31 = ssub.s32 %s18, %s30
    %s32 = ssub.s32 %s19, %s26
    %s33 = sor.u32 %s31, %s32
    %p34 = scmp.eq.s32.totalorder %s33, 0
    %s36 = sadd.s32 %s35, 1
    %s37 = scalar_select %p34, %s35, %s36
    %p40 = pneg %p34
    %p41 = scmp.eq.s32.totalorder %s11, 1
    %p42 = por %p40, %p41
    %p43 = scmp.ne.s32.totalorder %s35, %s38
    %p44 = scmp.eq.s32.totalorder %s11, 0
    %p45 = por %p43, %p44
    %p46 = scmp.ne.s32.totalorder %s35, %s38
    %p47 = scmp.eq.s32.totalorder %s16, 1
    %p48 = por %p46, %p47
    %p49 = scmp.ne.s32.totalorder %s38, %s39
    %p50 = scmp.eq.s32.totalorder %s16, 0
    %p51 = por %p49, %p50
    %p52 = scmp.ne.s32.totalorder %s38, %s39
    %p53 = scmp.eq.s32.totalorder %s17, 1
    %p54 = por %p52, %p53
    %p56 = scmp.ne.s32.totalorder %s39, %s55
    %p57 = scmp.eq.s32.totalorder %s17, 0
    %p58 = por %p56, %p57
    %s59 = ssub.s32 %s18, %s30
    %s60 = ssub.s32 %s19, %s26
    %s61 = sor.u32 %s59, %s60
    %p62 = scmp.eq.s32.totalorder %s61, 0
    %s64 = sadd.s32 %s63, 1
    %s65 = scalar_select %p62, %s63, %s64
    %p68 = pneg %p62
    %p69 = scmp.eq.s32.totalorder %s11, 1
    %p70 = por %p68, %p69
    %p71 = scmp.ne.s32.totalorder %s63, %s66
    %p72 = scmp.eq.s32.totalorder %s11, 0
    %p73 = por %p71, %p72
    %p74 = scmp.ne.s32.totalorder %s63, %s66
    %p75 = scmp.eq.s32.totalorder %s16, 1
    %p76 = por %p74, %p75
    %p77 = scmp.ne.s32.totalorder %s66, %s67
    %p78 = scmp.eq.s32.totalorder %s16, 0
    %p79 = por %p77, %p78
    %p80 = scmp.ne.s32.totalorder %s66, %s67
    %p81 = scmp.eq.s32.totalorder %s17, 1
    %p82 = por %p80, %p81
    %p84 = scmp.ne.s32.totalorder %s67, %s83
    %p85 = scmp.eq.s32.totalorder %s17, 0
    %p86 = por %p84, %p85
    %s87 = ssub.s32 %s18, %s30
    %s88 = ssub.s32 %s19, %s26
    %s89 = sor.u32 %s87, %s88
    %p90 = scmp.eq.s32.totalorder %s89, 0
    %s92 = sadd.s32 %s91, 1
    %s93 = scalar_select %p90, %s91, %s92
    %p96 = pneg %p90
    %p97 = scmp.eq.s32.totalorder %s11, 1
    %p98 = por %p96, %p97
    %p99 = scmp.ne.s32.totalorder %s91, %s94
    %p100 = scmp.eq.s32.totalorder %s11, 0
    %p101 = por %p99, %p100
    %p102 = scmp.ne.s32.totalorder %s91, %s94
    %p103 = scmp.eq.s32.totalorder %s16, 1
    %p104 = por %p102, %p103
    %p105 = scmp.ne.s32.totalorder %s94, %s95
    %p106 = scmp.eq.s32.totalorder %s16, 0
    %p107 = por %p105, %p106
    %p108 = scmp.ne.s32.totalorder %s94, %s95
    %p109 = scmp.eq.s32.totalorder %s17, 1
    %p110 = por %p108, %p109
    %p112 = scmp.ne.s32.totalorder %s95, %s111
    %p113 = scmp.eq.s32.totalorder %s17, 0
    %p114 = por %p112, %p113
    %s116 = sadd.s32 %s115, 1
    %p119 = scmp.eq.s32.totalorder %s11, 1
    %p120 = scmp.ne.s32.totalorder %s115, %s117
    %p121 = scmp.eq.s32.totalorder %s11, 0
    %p122 = por %p120, %p121
    %p123 = scmp.ne.s32.totalorder %s115, %s117
    %p124 = scmp.eq.s32.totalorder %s16, 1
    %p125 = por %p123, %p124
    %p126 = scmp.ne.s32.totalorder %s117, %s118
    %p127 = scmp.eq.s32.totalorder %s16, 0
    %p128 = por %p126, %p127
    %p129 = scmp.ne.s32.totalorder %s117, %s118
    %p130 = scmp.eq.s32.totalorder %s17, 1
    %p131 = por %p129, %p130
    %p133 = scmp.ne.s32.totalorder %s118, %s132
    %p134 = scmp.eq.s32.totalorder %s17, 0
    %p135 = por %p133, %p134
    %s137 = sadd.s32 %s136, 1
    %p140 = scmp.eq.s32.totalorder %s11, 1
    %p141 = scmp.ne.s32.totalorder %s136, %s138
    %p142 = scmp.eq.s32.totalorder %s11, 0
    %p143 = por %p141, %p142
    %p144 = scmp.ne.s32.totalorder %s136, %s138
    %p145 = scmp.eq.s32.totalorder %s16, 1
    %p146 = por %p144, %p145
    %p147 = scmp.ne.s32.totalorder %s138, %s139
    %p148 = scmp.eq.s32.totalorder %s16, 0
    %p149 = por %p147, %p148
    %p150 = scmp.ne.s32.totalorder %s138, %s139
    %p151 = scmp.eq.s32.totalorder %s17, 1
    %p152 = por %p150, %p151
    %p154 = scmp.ne.s32.totalorder %s139, %s153
    %p155 = scmp.eq.s32.totalorder %s17, 0
    %p156 = por %p154, %p155
    %s157 = ssub.s32 %s18, %s30
    %s158 = ssub.s32 %s19, %s26
    %s159 = sor.u32 %s157, %s158
    %p160 = scmp.eq.s32.totalorder %s159, 0
    %s162 = sadd.s32 %s161, 1
    %s163 = scalar_select %p160, %s161, %s162
    %p166 = pneg %p160
    %p167 = scmp.eq.s32.totalorder %s11, 1
    %p168 = por %p166, %p167
    %p169 = scmp.ne.s32.totalorder %s161, %s164
    %p170 = scmp.eq.s32.totalorder %s11, 0
    %p171 = por %p169, %p170
    %p172 = scmp.ne.s32.totalorder %s161, %s164
    %p173 = scmp.eq.s32.totalorder %s16, 1
    %p174 = por %p172, %p173
    %p175 = scmp.ne.s32.totalorder %s164, %s165
    %p176 = scmp.eq.s32.totalorder %s16, 0
    %p177 = por %p175, %p176
    %p178 = scmp.ne.s32.totalorder %s164, %s165
    %p179 = scmp.eq.s32.totalorder %s17, 1
    %p180 = por %p178, %p179
    %p182 = scmp.ne.s32.totalorder %s165, %s181
    %p183 = scmp.eq.s32.totalorder %s17, 0
    %p184 = por %p182, %p183
    %p185 = scmp.le.s32.totalorder 1, %s11
    %p186 = scmp.lt.s32.totalorder %s11, 3
    %p187 = pnand %p185, %p186
    %p188 = pneg %p187
    // Predicated region
    $region9: #{tpu_custom_call.1} parent=5 // pred_check
      _
    $region10: #{tpu_custom_call.1} parent=5 // pred_check_branch
      %190 = sbr.rel (%p187) target = $region12
    $region11: #{tpu_custom_call.1} parent=5 // pred_region
      %s191 = ssub.s32 %s11, 1
      // Predicated region
      $region13: #{tpu_custom_call.1} parent=11 // pred_check
        %p192 = pneg %p128
      $region14: #{tpu_custom_call.1} parent=11 // pred_check_branch
        %194 = sbr.rel (%p192) target = $region16
      $region15: #{tpu_custom_call.1} parent=11 // pred_region
        _
      $region16: #{tpu_custom_call.1} parent=11 // pred_fallthru
        _
      // Predicated region
      $region17: #{tpu_custom_call.1} parent=11 // pred_check
        %p195 = pneg %p149
      $region18: #{tpu_custom_call.1} parent=11 // pred_check_branch
        %197 = sbr.rel (%p195) target = $region20
      $region19: #{tpu_custom_call.1} parent=11 // pred_region
        _
      $region20: #{tpu_custom_call.1} parent=11 // pred_fallthru
        _
    $region12: #{tpu_custom_call.1} parent=5 // pred_fallthru
      _
    %p198 = scmp.lt.s32.totalorder %s11, 2
    // Predicated region
    $region21: #{tpu_custom_call.1} parent=5 // pred_check
      %p199 = pneg %p198
    $region22: #{tpu_custom_call.1} parent=5 // pred_check_branch
      %201 = sbr.rel (%p199) target = $region24
    $region23: #{tpu_custom_call.1} parent=5 // pred_region
      // Predicated region
      $region25: #{tpu_custom_call.1} parent=23 // pred_check
        %p202 = pneg %p45
      $region26: #{tpu_custom_call.1} parent=23 // pred_check_branch
        %204 = sbr.rel (%p202) target = $region28
      $region27: #{tpu_custom_call.1} parent=23 // pred_region
        %s205 = smul.u32 16, %s19
        %p206 = scmp.lt.s32.totalorder %s18, 1
        %s207 = scalar_select %p206, %s18, 1
        %p208 = scmp.lt.s32.totalorder %s205, 15
        %s209 = scalar_select %p208, %s205, 15
        %s210 = smul.addr %s209, 2
        %s211 = smul.addr %s207, 32
        %s212 = sadd.s32 %s210, %s211
        %s213 = smul.addr %s212, 8
        %s214 = scalar_lea.vmem %s0, %s213
        %s215 = smul.u32 16, %s19
      $region28: #{tpu_custom_call.1} parent=23 // pred_fallthru
        _
      // Predicated region
      $region29: #{tpu_custom_call.1} parent=23 // pred_check
        %p216 = pneg %p73
      $region30: #{tpu_custom_call.1} parent=23 // pred_check_branch
        %218 = sbr.rel (%p216) target = $region32
      $region31: #{tpu_custom_call.1} parent=23 // pred_region
        %p219 = scmp.lt.s32.totalorder %s18, 1
        %s220 = scalar_select %p219, %s18, 1
        %p221 = scmp.lt.s32.totalorder %s19, 0
        %s222 = scalar_select %p221, %s19, 0
        %s223 = smul.addr %s222, 2
        %s224 = smul.addr %s220, 2
        %s225 = sadd.s32 %s223, %s224
        %s226 = smul.addr %s225, 8
        %s227 = scalar_lea.vmem %s1, %s226
      $region32: #{tpu_custom_call.1} parent=23 // pred_fallthru
        _
      // Predicated region
      $region33: #{tpu_custom_call.1} parent=23 // pred_check
        %p228 = pneg %p101
      $region34: #{tpu_custom_call.1} parent=23 // pred_check_branch
        %230 = sbr.rel (%p228) target = $region36
      $region35: #{tpu_custom_call.1} parent=23 // pred_region
        %p231 = scmp.lt.s32.totalorder %s18, 1
        %s232 = scalar_select %p231, %s18, 1
        %p233 = scmp.lt.s32.totalorder %s19, 0
        %s234 = scalar_select %p233, %s19, 0
        %s235 = smul.addr %s234, 2
        %s236 = smul.addr %s232, 2
        %s237 = sadd.s32 %s235, %s236
        %s238 = smul.addr %s237, 8
        %s239 = scalar_lea.vmem %s2, %s238
      $region36: #{tpu_custom_call.1} parent=23 // pred_fallthru
        _
    $region24: #{tpu_custom_call.1} parent=5 // pred_fallthru
      _
    %p240 = scmp.le.s32.totalorder 1, %s11
    %p241 = scmp.lt.s32.totalorder %s11, 3
    %p242 = pnand %p240, %p241
    %p243 = pneg %p242
    // Predicated region
    $region37: #{tpu_custom_call.1} parent=5 // pred_check
      _
    $region38: #{tpu_custom_call.1} parent=5 // pred_check_branch
      %245 = sbr.rel (%p242) target = $region40
    $region39: #{tpu_custom_call.1} parent=5 // pred_region
      %s246 = ssub.s32 %s11, 1
      %s247 = smul.u32 16, %s21
      %p248 = scmp.lt.s32.totalorder %s20, 1
      %s249 = scalar_select %p248, %s20, 1
      %p250 = scmp.lt.s32.totalorder %s247, 15
      %s251 = scalar_select %p250, %s247, 15
      %s252 = smul.addr %s251, 2
      %s253 = smul.addr %s249, 32
      %s254 = sadd.s32 %s252, %s253
      %s255 = smul.addr %s254, 8
      %s256 = scalar_lea.vmem %s0, %s255
      %p257 = pneg %p51
      %p258 = pneg %p48
      %p259 = scmp.lt.s32.totalorder %s20, 1
      %s260 = scalar_select %p259, %s20, 1
      %p261 = scmp.lt.s32.totalorder %s21, 0
      %s262 = scalar_select %p261, %s21, 0
      %s263 = smul.addr %s262, 2
      %s264 = smul.addr %s260, 2
      %s265 = sadd.s32 %s263, %s264
      %s266 = smul.addr %s265, 8
      %s267 = scalar_lea.vmem %s1, %s266
      %p268 = pneg %p79
      %p269 = pneg %p76
      %p270 = scmp.lt.s32.totalorder %s20, 1
      %s271 = scalar_select %p270, %s20, 1
      %p272 = scmp.lt.s32.totalorder %s21, 0
      %s273 = scalar_select %p272, %s21, 0
      %s274 = smul.addr %s273, 2
      %s275 = smul.addr %s271, 2
      %s276 = sadd.s32 %s274, %s275
      %s277 = smul.addr %s276, 8
      %s278 = scalar_lea.vmem %s2, %s277
      %p279 = pneg %p107
      %p280 = pneg %p104
      %p281 = pneg %p128
      %p282 = pneg %p125
      %p283 = pneg %p149
      %p284 = pneg %p146
      %p285 = pneg %p177
      %p286 = pneg %p174
      %s287 = smul.u32 16, %s21
      %p288 = scmp.lt.s32.totalorder %s20, 1
      %s289 = scalar_select %p288, %s20, 1
      %p290 = scmp.lt.s32.totalorder %s287, 15
      %s291 = scalar_select %p290, %s287, 15
      %s292 = smul.addr %s291, 2
      %s293 = smul.addr %s289, 32
      %s294 = sadd.s32 %s292, %s293
      %s295 = smul.addr %s294, 8
      %s296 = scalar_lea.vmem %s5, %s295
      %s297 = smul.u32 16, %s21
      %p298 = scmp.lt.s32.totalorder %s20, 1
      %s299 = scalar_select %p298, %s20, 1
      %p300 = scmp.lt.s32.totalorder %s297, 15
      %s301 = scalar_select %p300, %s297, 15
      %s302 = smul.addr %s301, 2
      %s303 = smul.addr %s299, 32
      %s304 = sadd.s32 %s302, %s303
      %s305 = smul.addr %s304, 8
      %s306 = scalar_lea.vmem %s0, %s305
      %s307 = smul.u32 16, %s21
      %p308 = scmp.lt.s32.totalorder %s20, 1
      %s309 = scalar_select %p308, %s20, 1
      %p310 = scmp.lt.s32.totalorder %s21, 0
      %s311 = scalar_select %p310, %s21, 0
      %s312 = smul.addr %s311, 2
      %s313 = smul.addr %s309, 2
      %s314 = sadd.s32 %s312, %s313
      %s315 = smul.addr %s314, 8
      %s316 = scalar_lea.vmem %s1, %s315
      %p317 = scmp.lt.s32.totalorder %s20, 1
      %s318 = scalar_select %p317, %s20, 1
      %p319 = scmp.lt.s32.totalorder %s21, 0
      %s320 = scalar_select %p319, %s21, 0
      %s321 = smul.addr %s320, 2
      %s322 = smul.addr %s318, 2
      %s323 = sadd.s32 %s321, %s322
      %s324 = smul.addr %s323, 8
      %s325 = scalar_lea.vmem %s2, %s324
      %s326 = smul.u32 16, %s21
      %p327 = scmp.lt.s32.totalorder %s20, 1
      %s328 = scalar_select %p327, %s20, 1
      %p329 = scmp.lt.s32.totalorder %s326, 15
      %s330 = scalar_select %p329, %s326, 15
      %s331 = smul.addr %s330, 2
      %s332 = smul.addr %s328, 32
      %s333 = sadd.s32 %s331, %s332
      %s334 = smul.addr %s333, 8
      %s335 = scalar_lea.vmem %s5, %s334
      %s336 = smul.u32 16, %s21
      %v338 = vld [vmem:[%s316] sm:$0xff]
      %v339 = vld [vmem:[%s316 + $0x8] sm:$0xff]
      %v340 = vld [vmem:[%s306] sm:$0xff]
      %v341 = vld [vmem:[%s306 + $0x8] sm:$0xff]
      %v342 = vld [vmem:[%s306 + $0x10] sm:$0xff]
      %v343 = vld [vmem:[%s306 + $0x18] sm:$0xff]
      %v344 = vld [vmem:[%s306 + $0x20] sm:$0xff]
      %v345 = vld [vmem:[%s306 + $0x28] sm:$0xff]
      %v346 = vld [vmem:[%s306 + $0x30] sm:$0xff]
      %v347 = vld [vmem:[%s306 + $0x38] sm:$0xff]
      %v348 = vld [vmem:[%s306 + $0x40] sm:$0xff]
      %v349 = vld [vmem:[%s306 + $0x48] sm:$0xff]
      %v350 = vld [vmem:[%s306 + $0x50] sm:$0xff]
      %v351 = vld [vmem:[%s306 + $0x58] sm:$0xff]
      %v352 = vld [vmem:[%s306 + $0x60] sm:$0xff]
      %v353 = vld [vmem:[%s306 + $0x68] sm:$0xff]
      %v354 = vld [vmem:[%s306 + $0x70] sm:$0xff]
      %v355 = vld [vmem:[%s306 + $0x78] sm:$0xff]
      %v356 = vld [vmem:[%s306 + $0x80] sm:$0xff]
      %v357 = vld [vmem:[%s306 + $0x88] sm:$0xff]
      %v358 = vld [vmem:[%s306 + $0x90] sm:$0xff]
      %v359 = vld [vmem:[%s306 + $0x98] sm:$0xff]
      %v360 = vld [vmem:[%s306 + $0xa0] sm:$0xff]
      %v361 = vld [vmem:[%s306 + $0xa8] sm:$0xff]
      %v362 = vld [vmem:[%s306 + $0xb0] sm:$0xff]
      %v363 = vld [vmem:[%s306 + $0xb8] sm:$0xff]
      %v364 = vld [vmem:[%s306 + $0xc0] sm:$0xff]
      %v365 = vld [vmem:[%s306 + $0xc8] sm:$0xff]
      %v366 = vld [vmem:[%s306 + $0xd0] sm:$0xff]
      %v367 = vld [vmem:[%s306 + $0xd8] sm:$0xff]
      %v368 = vld [vmem:[%s306 + $0xe0] sm:$0xff]
      %v369 = vld [vmem:[%s306 + $0xe8] sm:$0xff]
      %v370 = vld [vmem:[%s306 + $0xf0] sm:$0xff]
      %v371 = vld [vmem:[%s306 + $0xf8] sm:$0xff]
      %v372 = vld [vmem:[%s325] sm:$0xff]
      %v373 = vld [vmem:[%s325 + $0x8] sm:$0xff]
      %v374 = vmax.f32 %v338, 0.0
      %v375 = vmax.f32 %v339, 0.0
      %v376 = vmax.f32 %v340, 0.0
      %v377 = vmax.f32 %v341, 0.0
      %v378 = vmax.f32 %v342, 0.0
      %v379 = vmax.f32 %v343, 0.0
      %v380 = vmax.f32 %v344, 0.0
      %v381 = vmax.f32 %v345, 0.0
      %v382 = vmax.f32 %v346, 0.0
      %v383 = vmax.f32 %v347, 0.0
      %v384 = vmax.f32 %v348, 0.0
      %v385 = vmax.f32 %v349, 0.0
      %v386 = vmax.f32 %v350, 0.0
      %v387 = vmax.f32 %v351, 0.0
      %v388 = vmax.f32 %v352, 0.0
      %v389 = vmax.f32 %v353, 0.0
      %v390 = vmax.f32 %v354, 0.0
      %v391 = vmax.f32 %v355, 0.0
      %v392 = vmax.f32 %v356, 0.0
      %v393 = vmax.f32 %v357, 0.0
      %v394 = vmax.f32 %v358, 0.0
      %v395 = vmax.f32 %v359, 0.0
      %v396 = vmax.f32 %v360, 0.0
      %v397 = vmax.f32 %v361, 0.0
      %v398 = vmax.f32 %v362, 0.0
      %v399 = vmax.f32 %v363, 0.0
      %v400 = vmax.f32 %v364, 0.0
      %v401 = vmax.f32 %v365, 0.0
      %v402 = vmax.f32 %v366, 0.0
      %v403 = vmax.f32 %v367, 0.0
      %v404 = vmax.f32 %v368, 0.0
      %v405 = vmax.f32 %v369, 0.0
      %v406 = vmax.f32 %v370, 0.0
      %v407 = vmax.f32 %v371, 0.0
      %v408 = vmax.f32 %v372, 0.0
      %v409 = vmax.f32 %v373, 0.0
      %vm410 = vcmask 31744
      %411 = vst.msk [vmem:[#allocation2 + $0x1] sm:$0xff] %vm410, %v374
      %412 = vst.msk [vmem:[#allocation2 + $0x9] sm:$0xff] %vm410, %v375
      %413 = vst.msk [vmem:[#allocation2 + $0x19] sm:$0xff] %vm410, %v376
      %414 = vst.msk [vmem:[#allocation2 + $0x21] sm:$0xff] %vm410, %v377
      %415 = vst.msk [vmem:[#allocation2 + $0x31] sm:$0xff] %vm410, %v378
      %416 = vst.msk [vmem:[#allocation2 + $0x39] sm:$0xff] %vm410, %v379
      %417 = vst.msk [vmem:[#allocation2 + $0x49] sm:$0xff] %vm410, %v380
      %418 = vst.msk [vmem:[#allocation2 + $0x51] sm:$0xff] %vm410, %v381
      %419 = vst.msk [vmem:[#allocation2 + $0x61] sm:$0xff] %vm410, %v382
      %420 = vst.msk [vmem:[#allocation2 + $0x69] sm:$0xff] %vm410, %v383
      %421 = vst.msk [vmem:[#allocation2 + $0x79] sm:$0xff] %vm410, %v384
      %422 = vst.msk [vmem:[#allocation2 + $0x81] sm:$0xff] %vm410, %v385
      %423 = vst.msk [vmem:[#allocation2 + $0x91] sm:$0xff] %vm410, %v386
      %424 = vst.msk [vmem:[#allocation2 + $0x99] sm:$0xff] %vm410, %v387
      %425 = vst.msk [vmem:[#allocation2 + $0xa9] sm:$0xff] %vm410, %v388
      %426 = vst.msk [vmem:[#allocation2 + $0xb1] sm:$0xff] %vm410, %v389
      %427 = vst.msk [vmem:[#allocation2 + $0xc1] sm:$0xff] %vm410, %v390
      %428 = vst.msk [vmem:[#allocation2 + $0xc9] sm:$0xff] %vm410, %v391
      %429 = vst.msk [vmem:[#allocation2 + $0xd9] sm:$0xff] %vm410, %v392
      %430 = vst.msk [vmem:[#allocation2 + $0xe1] sm:$0xff] %vm410, %v393
      %431 = vst.msk [vmem:[#allocation2 + $0xf1] sm:$0xff] %vm410, %v394
      %432 = vst.msk [vmem:[#allocation2 + $0xf9] sm:$0xff] %vm410, %v395
      %433 = vst.msk [vmem:[#allocation2 + $0x109] sm:$0xff] %vm410, %v396
      %434 = vst.msk [vmem:[#allocation2 + $0x111] sm:$0xff] %vm410, %v397
      %435 = vst.msk [vmem:[#allocation2 + $0x121] sm:$0xff] %vm410, %v398
      %436 = vst.msk [vmem:[#allocation2 + $0x129] sm:$0xff] %vm410, %v399
      %437 = vst.msk [vmem:[#allocation2 + $0x139] sm:$0xff] %vm410, %v400
      %438 = vst.msk [vmem:[#allocation2 + $0x141] sm:$0xff] %vm410, %v401
      %439 = vst.msk [vmem:[#allocation2 + $0x151] sm:$0xff] %vm410, %v402
      %440 = vst.msk [vmem:[#allocation2 + $0x159] sm:$0xff] %vm410, %v403
      %441 = vst.msk [vmem:[#allocation2 + $0x169] sm:$0xff] %vm410, %v404
      %442 = vst.msk [vmem:[#allocation2 + $0x171] sm:$0xff] %vm410, %v405
      %443 = vst.msk [vmem:[#allocation2 + $0x181] sm:$0xff] %vm410, %v406
      %444 = vst.msk [vmem:[#allocation2 + $0x189] sm:$0xff] %vm410, %v407
      %445 = vst.msk [vmem:[#allocation2 + $0x199] sm:$0xff] %vm410, %v408
      %446 = vst.msk [vmem:[#allocation2 + $0x1a1] sm:$0xff] %vm410, %v409
      %vm447 = vcmask 24576
      %448 = vst.msk [vmem:[#allocation2] sm:$0x1] %vm447, 0.0
      %449 = vst.msk [vmem:[#allocation2 + $0x18] sm:$0x1] %vm447, 0.0
      %450 = vst.msk [vmem:[#allocation2 + $0x30] sm:$0x1] %vm447, 0.0
      %451 = vst.msk [vmem:[#allocation2 + $0x48] sm:$0x1] %vm447, 0.0
      %452 = vst.msk [vmem:[#allocation2 + $0x60] sm:$0x1] %vm447, 0.0
      %453 = vst.msk [vmem:[#allocation2 + $0x78] sm:$0x1] %vm447, 0.0
      %454 = vst.msk [vmem:[#allocation2 + $0x90] sm:$0x1] %vm447, 0.0
      %455 = vst.msk [vmem:[#allocation2 + $0xa8] sm:$0x1] %vm447, 0.0
      %456 = vst.msk [vmem:[#allocation2 + $0xc0] sm:$0x1] %vm447, 0.0
      %457 = vst.msk [vmem:[#allocation2 + $0xd8] sm:$0x1] %vm447, 0.0
      %458 = vst.msk [vmem:[#allocation2 + $0xf0] sm:$0x1] %vm447, 0.0
      %459 = vst.msk [vmem:[#allocation2 + $0x108] sm:$0x1] %vm447, 0.0
      %460 = vst.msk [vmem:[#allocation2 + $0x120] sm:$0x1] %vm447, 0.0
      %461 = vst.msk [vmem:[#allocation2 + $0x138] sm:$0x1] %vm447, 0.0
      %462 = vst.msk [vmem:[#allocation2 + $0x150] sm:$0x1] %vm447, 0.0
      %463 = vst.msk [vmem:[#allocation2 + $0x168] sm:$0x1] %vm447, 0.0
      %464 = vst.msk [vmem:[#allocation2 + $0x180] sm:$0x1] %vm447, 0.0
      %465 = vst.msk [vmem:[#allocation2 + $0x198] sm:$0x1] %vm447, 0.0
      %466 = vst.msk [vmem:[#allocation2 + $0x11] sm:$0x1] %vm447, 0.0
      %467 = vst.msk [vmem:[#allocation2 + $0x29] sm:$0x1] %vm447, 0.0
      %468 = vst.msk [vmem:[#allocation2 + $0x41] sm:$0x1] %vm447, 0.0
      %469 = vst.msk [vmem:[#allocation2 + $0x59] sm:$0x1] %vm447, 0.0
      %470 = vst.msk [vmem:[#allocation2 + $0x71] sm:$0x1] %vm447, 0.0
      %471 = vst.msk [vmem:[#allocation2 + $0x89] sm:$0x1] %vm447, 0.0
      %472 = vst.msk [vmem:[#allocation2 + $0xa1] sm:$0x1] %vm447, 0.0
      %473 = vst.msk [vmem:[#allocation2 + $0xb9] sm:$0x1] %vm447, 0.0
      %474 = vst.msk [vmem:[#allocation2 + $0xd1] sm:$0x1] %vm447, 0.0
      %475 = vst.msk [vmem:[#allocation2 + $0xe9] sm:$0x1] %vm447, 0.0
      %476 = vst.msk [vmem:[#allocation2 + $0x101] sm:$0x1] %vm447, 0.0
      %477 = vst.msk [vmem:[#allocation2 + $0x119] sm:$0x1] %vm447, 0.0
      %478 = vst.msk [vmem:[#allocation2 + $0x131] sm:$0x1] %vm447, 0.0
      %479 = vst.msk [vmem:[#allocation2 + $0x149] sm:$0x1] %vm447, 0.0
      %480 = vst.msk [vmem:[#allocation2 + $0x161] sm:$0x1] %vm447, 0.0
      %481 = vst.msk [vmem:[#allocation2 + $0x179] sm:$0x1] %vm447, 0.0
      %482 = vst.msk [vmem:[#allocation2 + $0x191] sm:$0x1] %vm447, 0.0
      %483 = vst.msk [vmem:[#allocation2 + $0x1a9] sm:$0x1] %vm447, 0.0
      %v484 = vld [vmem:[#allocation2] sm:$0xff]
      %v485 = vld [vmem:[#allocation2 + $0x8] sm:$0xff]
      %v486 = vld [vmem:[#allocation2 + $0x10] sm:$0x3]
      %v487 = vld [vmem:[#allocation2 + $0x18] sm:$0xff]
      %v488 = vld [vmem:[#allocation2 + $0x20] sm:$0xff]
      %v489 = vld [vmem:[#allocation2 + $0x28] sm:$0x3]
      %v490 = vld [vmem:[#allocation2 + $0x30] sm:$0xff]
      %v491 = vld [vmem:[#allocation2 + $0x38] sm:$0xff]
      %v492 = vld [vmem:[#allocation2 + $0x40] sm:$0x3]
      %v493 = vld [vmem:[#allocation2 + $0x48] sm:$0xff]
      %v494 = vld [vmem:[#allocation2 + $0x50] sm:$0xff]
      %v495 = vld [vmem:[#allocation2 + $0x58] sm:$0x3]
      %v496 = vld [vmem:[#allocation2 + $0x60] sm:$0xff]
      %v497 = vld [vmem:[#allocation2 + $0x68] sm:$0xff]
      %v498 = vld [vmem:[#allocation2 + $0x70] sm:$0x3]
      %v499 = vld [vmem:[#allocation2 + $0x78] sm:$0xff]
      %v500 = vld [vmem:[#allocation2 + $0x80] sm:$0xff]
      %v501 = vld [vmem:[#allocation2 + $0x88] sm:$0x3]
      %v502 = vld [vmem:[#allocation2 + $0x90] sm:$0xff]
      %v503 = vld [vmem:[#allocation2 + $0x98] sm:$0xff]
      %v504 = vld [vmem:[#allocation2 + $0xa0] sm:$0x3]
      %v505 = vld [vmem:[#allocation2 + $0xa8] sm:$0xff]
      %v506 = vld [vmem:[#allocation2 + $0xb0] sm:$0xff]
      %v507 = vld [vmem:[#allocation2 + $0xb8] sm:$0x3]
      %v508 = vld [vmem:[#allocation2 + $0xc0] sm:$0xff]
      %v509 = vld [vmem:[#allocation2 + $0xc8] sm:$0xff]
      %v510 = vld [vmem:[#allocation2 + $0xd0] sm:$0x3]
      %v511 = vld [vmem:[#allocation2 + $0xd8] sm:$0xff]
      %v512 = vld [vmem:[#allocation2 + $0xe0] sm:$0xff]
      %v513 = vld [vmem:[#allocation2 + $0xe8] sm:$0x3]
      %v514 = vld [vmem:[#allocation2 + $0xf0] sm:$0xff]
      %v515 = vld [vmem:[#allocation2 + $0xf8] sm:$0xff]
      %v516 = vld [vmem:[#allocation2 + $0x100] sm:$0x3]
      %v517 = vld [vmem:[#allocation2 + $0x108] sm:$0xff]
      %v518 = vld [vmem:[#allocation2 + $0x110] sm:$0xff]
      %v519 = vld [vmem:[#allocation2 + $0x118] sm:$0x3]
      %v520 = vld [vmem:[#allocation2 + $0x120] sm:$0xff]
      %v521 = vld [vmem:[#allocation2 + $0x128] sm:$0xff]
      %v522 = vld [vmem:[#allocation2 + $0x130] sm:$0x3]
      %v523 = vld [vmem:[#allocation2 + $0x138] sm:$0xff]
      %v524 = vld [vmem:[#allocation2 + $0x140] sm:$0xff]
      %v525 = vld [vmem:[#allocation2 + $0x148] sm:$0x3]
      %v526 = vld [vmem:[#allocation2 + $0x150] sm:$0xff]
      %v527 = vld [vmem:[#allocation2 + $0x158] sm:$0xff]
      %v528 = vld [vmem:[#allocation2 + $0x160] sm:$0x3]
      %v529 = vld [vmem:[#allocation2 + $0x168] sm:$0xff]
      %v530 = vld [vmem:[#allocation2 + $0x170] sm:$0xff]
      %v531 = vld [vmem:[#allocation2 + $0x178] sm:$0x3]
      %v532 = vld [vmem:[#allocation2 + $0x180] sm:$0xff]
      %v533 = vld [vmem:[#allocation2 + $0x188] sm:$0xff]
      %v534 = vld [vmem:[#allocation2 + $0x190] sm:$0x3]
      %v535 = vld [vmem:[#allocation2 + $0x198] sm:$0xff]
      %v536 = vld [vmem:[#allocation2 + $0x1a0] sm:$0xff]
      %v537 = vld [vmem:[#allocation2 + $0x1a8] sm:$0x3]
      %v538 = vpack.c.bf16 %v484, %v484
      %v539 = vpack.c.bf16 %v485, %v485
      %v540 = vpack.c.bf16 %v486, %v486
      %v541 = vpack.c.bf16 %v487, %v487
      %v542 = vpack.c.bf16 %v488, %v488
      %v543 = vpack.c.bf16 %v489, %v489
      %v544 = vpack.c.bf16 %v490, %v490
      %v545 = vpack.c.bf16 %v491, %v491
      %v546 = vpack.c.bf16 %v492, %v492
      %v547 = vpack.c.bf16 %v493, %v493
      %v548 = vpack.c.bf16 %v494, %v494
      %v549 = vpack.c.bf16 %v495, %v495
      %v550 = vpack.c.bf16 %v496, %v496
      %v551 = vpack.c.bf16 %v497, %v497
      %v552 = vpack.c.bf16 %v498, %v498
      %v553 = vpack.c.bf16 %v499, %v499
      %v554 = vpack.c.bf16 %v500, %v500
      %v555 = vpack.c.bf16 %v501, %v501
      %v556 = vpack.c.bf16 %v502, %v502
      %v557 = vpack.c.bf16 %v503, %v503
      %v558 = vpack.c.bf16 %v504, %v504
      %v559 = vpack.c.bf16 %v505, %v505
      %v560 = vpack.c.bf16 %v506, %v506
      %v561 = vpack.c.bf16 %v507, %v507
      %v562 = vpack.c.bf16 %v508, %v508
      %v563 = vpack.c.bf16 %v509, %v509
      %v564 = vpack.c.bf16 %v510, %v510
      %v565 = vpack.c.bf16 %v511, %v511
      %v566 = vpack.c.bf16 %v512, %v512
      %v567 = vpack.c.bf16 %v513, %v513
      %v568 = vpack.c.bf16 %v514, %v514
      %v569 = vpack.c.bf16 %v515, %v515
      %v570 = vpack.c.bf16 %v516, %v516
      %v571 = vpack.c.bf16 %v517, %v517
      %v572 = vpack.c.bf16 %v518, %v518
      %v573 = vpack.c.bf16 %v519, %v519
      %v574 = vpack.c.bf16 %v520, %v520
      %v575 = vpack.c.bf16 %v521, %v521
      %v576 = vpack.c.bf16 %v522, %v522
      %v577 = vpack.c.bf16 %v523, %v523
      %v578 = vpack.c.bf16 %v524, %v524
      %v579 = vpack.c.bf16 %v525, %v525
      %v580 = vpack.c.bf16 %v526, %v526
      %v581 = vpack.c.bf16 %v527, %v527
      %v582 = vpack.c.bf16 %v528, %v528
      %v583 = vpack.c.bf16 %v529, %v529
      %v584 = vpack.c.bf16 %v530, %v530
      %v585 = vpack.c.bf16 %v531, %v531
      %v586 = vpack.c.bf16 %v532, %v532
      %v587 = vpack.c.bf16 %v533, %v533
      %v588 = vpack.c.bf16 %v534, %v534
      %v589 = vpack.c.bf16 %v535, %v535
      %v590 = vpack.c.bf16 %v536, %v536
      %v591 = vpack.c.bf16 %v537, %v537
      %vm592 = vcmask 27648
      %593 = vst.msk [vmem:[#allocation3] sm:$0xf] %vm592, %v538
      %594 = vst.msk [vmem:[#allocation3 + $0x4] sm:$0xf] %vm592, %v539
      %595 = vst.msk [vmem:[#allocation3 + $0x8] sm:$0xf] %vm592, %v541
      %596 = vst.msk [vmem:[#allocation3 + $0xc] sm:$0xf] %vm592, %v542
      %597 = vst.msk [vmem:[#allocation3 + $0x10] sm:$0xf] %vm592, %v544
      %598 = vst.msk [vmem:[#allocation3 + $0x14] sm:$0xf] %vm592, %v545
      %599 = vst.msk [vmem:[#allocation3 + $0x18] sm:$0xf] %vm592, %v547
      %600 = vst.msk [vmem:[#allocation3 + $0x1c] sm:$0xf] %vm592, %v548
      %601 = vst.msk [vmem:[#allocation3 + $0x20] sm:$0xf] %vm592, %v550
      %602 = vst.msk [vmem:[#allocation3 + $0x24] sm:$0xf] %vm592, %v551
      %603 = vst.msk [vmem:[#allocation3 + $0x28] sm:$0xf] %vm592, %v553
      %604 = vst.msk [vmem:[#allocation3 + $0x2c] sm:$0xf] %vm592, %v554
      %605 = vst.msk [vmem:[#allocation3 + $0x30] sm:$0xf] %vm592, %v556
      %606 = vst.msk [vmem:[#allocation3 + $0x34] sm:$0xf] %vm592, %v557
      %607 = vst.msk [vmem:[#allocation3 + $0x38] sm:$0xf] %vm592, %v559
      %608 = vst.msk [vmem:[#allocation3 + $0x3c] sm:$0xf] %vm592, %v560
      %609 = vst.msk [vmem:[#allocation3 + $0x40] sm:$0xf] %vm592, %v562
      %610 = vst.msk [vmem:[#allocation3 + $0x44] sm:$0xf] %vm592, %v563
      %611 = vst.msk [vmem:[#allocation3 + $0x48] sm:$0xf] %vm592, %v565
      %612 = vst.msk [vmem:[#allocation3 + $0x4c] sm:$0xf] %vm592, %v566
      %613 = vst.msk [vmem:[#allocation3 + $0x50] sm:$0xf] %vm592, %v568
      %614 = vst.msk [vmem:[#allocation3 + $0x54] sm:$0xf] %vm592, %v569
      %615 = vst.msk [vmem:[#allocation3 + $0x58] sm:$0xf] %vm592, %v571
      %616 = vst.msk [vmem:[#allocation3 + $0x5c] sm:$0xf] %vm592, %v572
      %617 = vst.msk [vmem:[#allocation3 + $0x60] sm:$0xf] %vm592, %v574
      %618 = vst.msk [vmem:[#allocation3 + $0x64] sm:$0xf] %vm592, %v575
      %619 = vst.msk [vmem:[#allocation3 + $0x68] sm:$0xf] %vm592, %v577
      %620 = vst.msk [vmem:[#allocation3 + $0x6c] sm:$0xf] %vm592, %v578
      %621 = vst.msk [vmem:[#allocation3 + $0x70] sm:$0xf] %vm592, %v580
      %622 = vst.msk [vmem:[#allocation3 + $0x74] sm:$0xf] %vm592, %v581
      %623 = vst.msk [vmem:[#allocation3 + $0x78] sm:$0xf] %vm592, %v583
      %624 = vst.msk [vmem:[#allocation3 + $0x7c] sm:$0xf] %vm592, %v584
      %vm625 = vsmask.f32 3328
      %vm626 = vsmask.f32 7440
      %vm627 = vmor %vm625, %vm626
      %v629 = vshrl.u32 %v538, 16
      %v631 = vrot.slane %v629, 4
      %v632 = vshll.u32 %v538, 16
      %v634 = vrot.slane %v632, 5
      %v635 = vor.u32 %v631, %v634
      %v636 = vrot.slane %v635, 4
      %v638 = vshll.u32 %v539, 16
      %v640 = vrot.slane %v638, 5
      %v641 = vsel %vm627, %v636, %v640
      %v642 = vshrl.u32 %v539, 16
      %v644 = vrot.slane %v642, 4
      %v645 = vor.u32 %v644, %v640
      %v646 = vrot.slane %v645, 4
      %v648 = vshll.u32 %v540, 16
      %v650 = vrot.slane %v648, 5
      %v651 = vsel %vm627, %v646, %v650
      %v653 = vshrl.u32 %v541, 16
      %v655 = vrot.slane %v653, 4
      %v656 = vshll.u32 %v541, 16
      %v658 = vrot.slane %v656, 5
      %v659 = vor.u32 %v655, %v658
      %v660 = vrot.slane %v659, 4
      %v662 = vshll.u32 %v542, 16
      %v664 = vrot.slane %v662, 5
      %v665 = vsel %vm627, %v660, %v664
      %v666 = vshrl.u32 %v542, 16
      %v668 = vrot.slane %v666, 4
      %v669 = vor.u32 %v668, %v664
      %v670 = vrot.slane %v669, 4
      %v672 = vshll.u32 %v543, 16
      %v674 = vrot.slane %v672, 5
      %v675 = vsel %vm627, %v670, %v674
      %v677 = vshrl.u32 %v544, 16
      %v679 = vrot.slane %v677, 4
      %v680 = vshll.u32 %v544, 16
      %v682 = vrot.slane %v680, 5
      %v683 = vor.u32 %v679, %v682
      %v684 = vrot.slane %v683, 4
      %v686 = vshll.u32 %v545, 16
      %v688 = vrot.slane %v686, 5
      %v689 = vsel %vm627, %v684, %v688
      %v690 = vshrl.u32 %v545, 16
      %v692 = vrot.slane %v690, 4
      %v693 = vor.u32 %v692, %v688
      %v694 = vrot.slane %v693, 4
      %v696 = vshll.u32 %v546, 16
      %v698 = vrot.slane %v696, 5
      %v699 = vsel %vm627, %v694, %v698
      %v701 = vshrl.u32 %v547, 16
      %v703 = vrot.slane %v701, 4
      %v704 = vshll.u32 %v547, 16
      %v706 = vrot.slane %v704, 5
      %v707 = vor.u32 %v703, %v706
      %v708 = vrot.slane %v707, 4
      %v710 = vshll.u32 %v548, 16
      %v712 = vrot.slane %v710, 5
      %v713 = vsel %vm627, %v708, %v712
      %v714 = vshrl.u32 %v548, 16
      %v716 = vrot.slane %v714, 4
      %v717 = vor.u32 %v716, %v712
      %v718 = vrot.slane %v717, 4
      %v720 = vshll.u32 %v549, 16
      %v722 = vrot.slane %v720, 5
      %v723 = vsel %vm627, %v718, %v722
      %v725 = vshrl.u32 %v550, 16
      %v727 = vrot.slane %v725, 4
      %v728 = vshll.u32 %v550, 16
      %v730 = vrot.slane %v728, 5
      %v731 = vor.u32 %v727, %v730
      %v732 = vrot.slane %v731, 4
      %v734 = vshll.u32 %v551, 16
      %v736 = vrot.slane %v734, 5
      %v737 = vsel %vm627, %v732, %v736
      %v738 = vshrl.u32 %v551, 16
      %v740 = vrot.slane %v738, 4
      %v741 = vor.u32 %v740, %v736
      %v742 = vrot.slane %v741, 4
      %v744 = vshll.u32 %v552, 16
      %v746 = vrot.slane %v744, 5
      %v747 = vsel %vm627, %v742, %v746
      %v749 = vshrl.u32 %v553, 16
      %v751 = vrot.slane %v749, 4
      %v752 = vshll.u32 %v553, 16
      %v754 = vrot.slane %v752, 5
      %v755 = vor.u32 %v751, %v754
      %v756 = vrot.slane %v755, 4
      %v758 = vshll.u32 %v554, 16
      %v760 = vrot.slane %v758, 5
      %v761 = vsel %vm627, %v756, %v760
      %v762 = vshrl.u32 %v554, 16
      %v764 = vrot.slane %v762, 4
      %v765 = vor.u32 %v764, %v760
      %v766 = vrot.slane %v765, 4
      %v768 = vshll.u32 %v555, 16
      %v770 = vrot.slane %v768, 5
      %v771 = vsel %vm627, %v766, %v770
      %v773 = vshrl.u32 %v556, 16
      %v775 = vrot.slane %v773, 4
      %v776 = vshll.u32 %v556, 16
      %v778 = vrot.slane %v776, 5
      %v779 = vor.u32 %v775, %v778
      %v780 = vrot.slane %v779, 4
      %v782 = vshll.u32 %v557, 16
      %v784 = vrot.slane %v782, 5
      %v785 = vsel %vm627, %v780, %v784
      %v786 = vshrl.u32 %v557, 16
      %v788 = vrot.slane %v786, 4
      %v789 = vor.u32 %v788, %v784
      %v790 = vrot.slane %v789, 4
      %v792 = vshll.u32 %v558, 16
      %v794 = vrot.slane %v792, 5
      %v795 = vsel %vm627, %v790, %v794
      %v797 = vshrl.u32 %v559, 16
      %v799 = vrot.slane %v797, 4
      %v800 = vshll.u32 %v559, 16
      %v802 = vrot.slane %v800, 5
      %v803 = vor.u32 %v799, %v802
      %v804 = vrot.slane %v803, 4
      %v806 = vshll.u32 %v560, 16
      %v808 = vrot.slane %v806, 5
      %v809 = vsel %vm627, %v804, %v808
      %v810 = vshrl.u32 %v560, 16
      %v812 = vrot.slane %v810, 4
      %v813 = vor.u32 %v812, %v808
      %v814 = vrot.slane %v813, 4
      %v816 = vshll.u32 %v561, 16
      %v818 = vrot.slane %v816, 5
      %v819 = vsel %vm627, %v814, %v818
      %v821 = vshrl.u32 %v562, 16
      %v823 = vrot.slane %v821, 4
      %v824 = vshll.u32 %v562, 16
      %v826 = vrot.slane %v824, 5
      %v827 = vor.u32 %v823, %v826
      %v828 = vrot.slane %v827, 4
      %v830 = vshll.u32 %v563, 16
      %v832 = vrot.slane %v830, 5
      %v833 = vsel %vm627, %v828, %v832
      %v834 = vshrl.u32 %v563, 16
      %v836 = vrot.slane %v834, 4
      %v837 = vor.u32 %v836, %v832
      %v838 = vrot.slane %v837, 4
      %v840 = vshll.u32 %v564, 16
      %v842 = vrot.slane %v840, 5
      %v843 = vsel %vm627, %v838, %v842
      %v845 = vshrl.u32 %v565, 16
      %v847 = vrot.slane %v845, 4
      %v848 = vshll.u32 %v565, 16
      %v850 = vrot.slane %v848, 5
      %v851 = vor.u32 %v847, %v850
      %v852 = vrot.slane %v851, 4
      %v854 = vshll.u32 %v566, 16
      %v856 = vrot.slane %v854, 5
      %v857 = vsel %vm627, %v852, %v856
      %v858 = vshrl.u32 %v566, 16
      %v860 = vrot.slane %v858, 4
      %v861 = vor.u32 %v860, %v856
      %v862 = vrot.slane %v861, 4
      %v864 = vshll.u32 %v567, 16
      %v866 = vrot.slane %v864, 5
      %v867 = vsel %vm627, %v862, %v866
      %v869 = vshrl.u32 %v568, 16
      %v871 = vrot.slane %v869, 4
      %v872 = vshll.u32 %v568, 16
      %v874 = vrot.slane %v872, 5
      %v875 = vor.u32 %v871, %v874
      %v876 = vrot.slane %v875, 4
      %v878 = vshll.u32 %v569, 16
      %v880 = vrot.slane %v878, 5
      %v881 = vsel %vm627, %v876, %v880
      %v882 = vshrl.u32 %v569, 16
      %v884 = vrot.slane %v882, 4
      %v885 = vor.u32 %v884, %v880
      %v886 = vrot.slane %v885, 4
      %v888 = vshll.u32 %v570, 16
      %v890 = vrot.slane %v888, 5
      %v891 = vsel %vm627, %v886, %v890
      %v893 = vshrl.u32 %v571, 16
      %v895 = vrot.slane %v893, 4
      %v896 = vshll.u32 %v571, 16
      %v898 = vrot.slane %v896, 5
      %v899 = vor.u32 %v895, %v898
      %v900 = vrot.slane %v899, 4
      %v902 = vshll.u32 %v572, 16
      %v904 = vrot.slane %v902, 5
      %v905 = vsel %vm627, %v900, %v904
      %v906 = vshrl.u32 %v572, 16
      %v908 = vrot.slane %v906, 4
      %v909 = vor.u32 %v908, %v904
      %v910 = vrot.slane %v909, 4
      %v912 = vshll.u32 %v573, 16
      %v914 = vrot.slane %v912, 5
      %v915 = vsel %vm627, %v910, %v914
      %v917 = vshrl.u32 %v574, 16
      %v919 = vrot.slane %v917, 4
      %v920 = vshll.u32 %v574, 16
      %v922 = vrot.slane %v920, 5
      %v923 = vor.u32 %v919, %v922
      %v924 = vrot.slane %v923, 4
      %v926 = vshll.u32 %v575, 16
      %v928 = vrot.slane %v926, 5
      %v929 = vsel %vm627, %v924, %v928
      %v930 = vshrl.u32 %v575, 16
      %v932 = vrot.slane %v930, 4
      %v933 = vor.u32 %v932, %v928
      %v934 = vrot.slane %v933, 4
      %v936 = vshll.u32 %v576, 16
      %v938 = vrot.slane %v936, 5
      %v939 = vsel %vm627, %v934, %v938
      %v941 = vshrl.u32 %v577, 16
      %v943 = vrot.slane %v941, 4
      %v944 = vshll.u32 %v577, 16
      %v946 = vrot.slane %v944, 5
      %v947 = vor.u32 %v943, %v946
      %v948 = vrot.slane %v947, 4
      %v950 = vshll.u32 %v578, 16
      %v952 = vrot.slane %v950, 5
      %v953 = vsel %vm627, %v948, %v952
      %v954 = vshrl.u32 %v578, 16
      %v956 = vrot.slane %v954, 4
      %v957 = vor.u32 %v956, %v952
      %v958 = vrot.slane %v957, 4
      %v960 = vshll.u32 %v579, 16
      %v962 = vrot.slane %v960, 5
      %v963 = vsel %vm627, %v958, %v962
      %v965 = vshrl.u32 %v580, 16
      %v967 = vrot.slane %v965, 4
      %v968 = vshll.u32 %v580, 16
      %v970 = vrot.slane %v968, 5
      %v971 = vor.u32 %v967, %v970
      %v972 = vrot.slane %v971, 4
      %v974 = vshll.u32 %v581, 16
      %v976 = vrot.slane %v974, 5
      %v977 = vsel %vm627, %v972, %v976
      %v978 = vshrl.u32 %v581, 16
      %v980 = vrot.slane %v978, 4
      %v981 = vor.u32 %v980, %v976
      %v982 = vrot.slane %v981, 4
      %v984 = vshll.u32 %v582, 16
      %v986 = vrot.slane %v984, 5
      %v987 = vsel %vm627, %v982, %v986
      %v989 = vshrl.u32 %v583, 16
      %v991 = vrot.slane %v989, 4
      %v992 = vshll.u32 %v583, 16
      %v994 = vrot.slane %v992, 5
      %v995 = vor.u32 %v991, %v994
      %v996 = vrot.slane %v995, 4
      %v998 = vshll.u32 %v584, 16
      %v1000 = vrot.slane %v998, 5
      %v1001 = vsel %vm627, %v996, %v1000
      %v1002 = vshrl.u32 %v584, 16
      %v1004 = vrot.slane %v1002, 4
      %v1005 = vor.u32 %v1004, %v1000
      %v1006 = vrot.slane %v1005, 4
      %v1008 = vshll.u32 %v585, 16
      %v1010 = vrot.slane %v1008, 5
      %v1011 = vsel %vm627, %v1006, %v1010
      %1012 = vrot.lane.b32.xlu0 %v641, 4
      %v1013 = vpop.permute.xlu0 %1012
      %1014 = vrot.lane.b32.xlu0 %v651, 4
      %v1015 = vpop.permute.xlu0 %1014
      %1016 = vrot.lane.b32.xlu0 %v665, 4
      %v1017 = vpop.permute.xlu0 %1016
      %1018 = vrot.lane.b32.xlu0 %v675, 4
      %v1019 = vpop.permute.xlu0 %1018
      %1020 = vrot.lane.b32.xlu0 %v689, 4
      %v1021 = vpop.permute.xlu0 %1020
      %1022 = vrot.lane.b32.xlu0 %v699, 4
      %v1023 = vpop.permute.xlu0 %1022
      %1024 = vrot.lane.b32.xlu0 %v713, 4
      %v1025 = vpop.permute.xlu0 %1024
      %1026 = vrot.lane.b32.xlu0 %v723, 4
      %v1027 = vpop.permute.xlu0 %1026
      %1028 = vrot.lane.b32.xlu0 %v737, 4
      %v1029 = vpop.permute.xlu0 %1028
      %1030 = vrot.lane.b32.xlu0 %v747, 4
      %v1031 = vpop.permute.xlu0 %1030
      %1032 = vrot.lane.b32.xlu0 %v761, 4
      %v1033 = vpop.permute.xlu0 %1032
      %1034 = vrot.lane.b32.xlu0 %v771, 4
      %v1035 = vpop.permute.xlu0 %1034
      %1036 = vrot.lane.b32.xlu0 %v785, 4
      %v1037 = vpop.permute.xlu0 %1036
      %1038 = vrot.lane.b32.xlu0 %v795, 4
      %v1039 = vpop.permute.xlu0 %1038
      %1040 = vrot.lane.b32.xlu0 %v809, 4
      %v1041 = vpop.permute.xlu0 %1040
      %1042 = vrot.lane.b32.xlu0 %v819, 4
      %v1043 = vpop.permute.xlu0 %1042
      %1044 = vrot.lane.b32.xlu0 %v833, 4
      %v1045 = vpop.permute.xlu0 %1044
      %1046 = vrot.lane.b32.xlu0 %v843, 4
      %v1047 = vpop.permute.xlu0 %1046
      %1048 = vrot.lane.b32.xlu0 %v857, 4
      %v1049 = vpop.permute.xlu0 %1048
      %1050 = vrot.lane.b32.xlu0 %v867, 4
      %v1051 = vpop.permute.xlu0 %1050
      %1052 = vrot.lane.b32.xlu0 %v881, 4
      %v1053 = vpop.permute.xlu0 %1052
      %1054 = vrot.lane.b32.xlu0 %v891, 4
      %v1055 = vpop.permute.xlu0 %1054
      %1056 = vrot.lane.b32.xlu0 %v905, 4
      %v1057 = vpop.permute.xlu0 %1056
      %1058 = vrot.lane.b32.xlu0 %v915, 4
      %v1059 = vpop.permute.xlu0 %1058
      %1060 = vrot.lane.b32.xlu0 %v929, 4
      %v1061 = vpop.permute.xlu0 %1060
      %1062 = vrot.lane.b32.xlu0 %v939, 4
      %v1063 = vpop.permute.xlu0 %1062
      %1064 = vrot.lane.b32.xlu0 %v953, 4
      %v1065 = vpop.permute.xlu0 %1064
      %1066 = vrot.lane.b32.xlu0 %v963, 4
      %v1067 = vpop.permute.xlu0 %1066
      %1068 = vrot.lane.b32.xlu0 %v977, 4
      %v1069 = vpop.permute.xlu0 %1068
      %1070 = vrot.lane.b32.xlu0 %v987, 4
      %v1071 = vpop.permute.xlu0 %1070
      %1072 = vrot.lane.b32.xlu0 %v1001, 4
      %v1073 = vpop.permute.xlu0 %1072
      %1074 = vrot.lane.b32.xlu0 %v1011, 4
      %v1075 = vpop.permute.xlu0 %1074
      %vm1108 = vcmask 60448
      %1109 = vst.msk [vmem:[#allocation3] sm:$0xf] %vm1108, %v1013
      %1110 = vst.msk [vmem:[#allocation3 + $0x4] sm:$0xf] %vm1108, %v1015
      %1111 = vst.msk [vmem:[#allocation3 + $0x8] sm:$0xf] %vm1108, %v1017
      %1112 = vst.msk [vmem:[#allocation3 + $0xc] sm:$0xf] %vm1108, %v1019
      %1113 = vst.msk [vmem:[#allocation3 + $0x10] sm:$0xf] %vm1108, %v1021
      %1114 = vst.msk [vmem:[#allocation3 + $0x14] sm:$0xf] %vm1108, %v1023
      %1115 = vst.msk [vmem:[#allocation3 + $0x18] sm:$0xf] %vm1108, %v1025
      %1116 = vst.msk [vmem:[#allocation3 + $0x1c] sm:$0xf] %vm1108, %v1027
      %1117 = vst.msk [vmem:[#allocation3 + $0x20] sm:$0xf] %vm1108, %v1029
      %1118 = vst.msk [vmem:[#allocation3 + $0x24] sm:$0xf] %vm1108, %v1031
      %1119 = vst.msk [vmem:[#allocation3 + $0x28] sm:$0xf] %vm1108, %v1033
      %1120 = vst.msk [vmem:[#allocation3 + $0x2c] sm:$0xf] %vm1108, %v1035
      %1121 = vst.msk [vmem:[#allocation3 + $0x30] sm:$0xf] %vm1108, %v1037
      %1122 = vst.msk [vmem:[#allocation3 + $0x34] sm:$0xf] %vm1108, %v1039
      %1123 = vst.msk [vmem:[#allocation3 + $0x38] sm:$0xf] %vm1108, %v1041
      %1124 = vst.msk [vmem:[#allocation3 + $0x3c] sm:$0xf] %vm1108, %v1043
      %1125 = vst.msk [vmem:[#allocation3 + $0x40] sm:$0xf] %vm1108, %v1045
      %1126 = vst.msk [vmem:[#allocation3 + $0x44] sm:$0xf] %vm1108, %v1047
      %1127 = vst.msk [vmem:[#allocation3 + $0x48] sm:$0xf] %vm1108, %v1049
      %1128 = vst.msk [vmem:[#allocation3 + $0x4c] sm:$0xf] %vm1108, %v1051
      %1129 = vst.msk [vmem:[#allocation3 + $0x50] sm:$0xf] %vm1108, %v1053
      %1130 = vst.msk [vmem:[#allocation3 + $0x54] sm:$0xf] %vm1108, %v1055
      %1131 = vst.msk [vmem:[#allocation3 + $0x58] sm:$0xf] %vm1108, %v1057
      %1132 = vst.msk [vmem:[#allocation3 + $0x5c] sm:$0xf] %vm1108, %v1059
      %1133 = vst.msk [vmem:[#allocation3 + $0x60] sm:$0xf] %vm1108, %v1061
      %1134 = vst.msk [vmem:[#allocation3 + $0x64] sm:$0xf] %vm1108, %v1063
      %1135 = vst.msk [vmem:[#allocation3 + $0x68] sm:$0xf] %vm1108, %v1065
      %1136 = vst.msk [vmem:[#allocation3 + $0x6c] sm:$0xf] %vm1108, %v1067
      %1137 = vst.msk [vmem:[#allocation3 + $0x70] sm:$0xf] %vm1108, %v1069
      %1138 = vst.msk [vmem:[#allocation3 + $0x74] sm:$0xf] %vm1108, %v1071
      %1139 = vst.msk [vmem:[#allocation3 + $0x78] sm:$0xf] %vm1108, %v1073
      %1140 = vst.msk [vmem:[#allocation3 + $0x7c] sm:$0xf] %vm1108, %v1075
      %vm1189 = vcmask 1042432
      %vm1190 = vcmask 1046532
      %vm1191 = vmor %vm1189, %vm1190
      %v1192 = vrot.slane %v538, 5
      %v1193 = vrot.slane %v1192, 4
      %v1194 = vrot.slane %v539, 5
      %v1195 = vsel %vm1191, %v1193, %v1194
      %v1196 = vrot.slane %v1194, 4
      %v1197 = vrot.slane %v540, 5
      %v1198 = vsel %vm1191, %v1196, %v1197
      %v1199 = vrot.slane %v541, 5
      %v1200 = vrot.slane %v1199, 4
      %v1201 = vrot.slane %v542, 5
      %v1202 = vsel %vm1191, %v1200, %v1201
      %v1203 = vrot.slane %v1201, 4
      %v1204 = vrot.slane %v543, 5
      %v1205 = vsel %vm1191, %v1203, %v1204
      %v1206 = vrot.slane %v544, 5
      %v1207 = vrot.slane %v1206, 4
      %v1208 = vrot.slane %v545, 5
      %v1209 = vsel %vm1191, %v1207, %v1208
      %v1210 = vrot.slane %v1208, 4
      %v1211 = vrot.slane %v546, 5
      %v1212 = vsel %vm1191, %v1210, %v1211
      %v1213 = vrot.slane %v547, 5
      %v1214 = vrot.slane %v1213, 4
      %v1215 = vrot.slane %v548, 5
      %v1216 = vsel %vm1191, %v1214, %v1215
      %v1217 = vrot.slane %v1215, 4
      %v1218 = vrot.slane %v549, 5
      %v1219 = vsel %vm1191, %v1217, %v1218
      %v1220 = vrot.slane %v550, 5
      %v1221 = vrot.slane %v1220, 4
      %v1222 = vrot.slane %v551, 5
      %v1223 = vsel %vm1191, %v1221, %v1222
      %v1224 = vrot.slane %v1222, 4
      %v1225 = vrot.slane %v552, 5
      %v1226 = vsel %vm1191, %v1224, %v1225
      %v1227 = vrot.slane %v553, 5
      %v1228 = vrot.slane %v1227, 4
      %v1229 = vrot.slane %v554, 5
      %v1230 = vsel %vm1191, %v1228, %v1229
      %v1231 = vrot.slane %v1229, 4
      %v1232 = vrot.slane %v555, 5
      %v1233 = vsel %vm1191, %v1231, %v1232
      %v1234 = vrot.slane %v556, 5
      %v1235 = vrot.slane %v1234, 4
      %v1236 = vrot.slane %v557, 5
      %v1237 = vsel %vm1191, %v1235, %v1236
      %v1238 = vrot.slane %v1236, 4
      %v1239 = vrot.slane %v558, 5
      %v1240 = vsel %vm1191, %v1238, %v1239
      %v1241 = vrot.slane %v559, 5
      %v1242 = vrot.slane %v1241, 4
      %v1243 = vrot.slane %v560, 5
      %v1244 = vsel %vm1191, %v1242, %v1243
      %v1245 = vrot.slane %v1243, 4
      %v1246 = vrot.slane %v561, 5
      %v1247 = vsel %vm1191, %v1245, %v1246
      %v1248 = vrot.slane %v562, 5
      %v1249 = vrot.slane %v1248, 4
      %v1250 = vrot.slane %v563, 5
      %v1251 = vsel %vm1191, %v1249, %v1250
      %v1252 = vrot.slane %v1250, 4
      %v1253 = vrot.slane %v564, 5
      %v1254 = vsel %vm1191, %v1252, %v1253
      %v1255 = vrot.slane %v565, 5
      %v1256 = vrot.slane %v1255, 4
      %v1257 = vrot.slane %v566, 5
      %v1258 = vsel %vm1191, %v1256, %v1257
      %v1259 = vrot.slane %v1257, 4
      %v1260 = vrot.slane %v567, 5
      %v1261 = vsel %vm1191, %v1259, %v1260
      %v1262 = vrot.slane %v568, 5
      %v1263 = vrot.slane %v1262, 4
      %v1264 = vrot.slane %v569, 5
      %v1265 = vsel %vm1191, %v1263, %v1264
      %v1266 = vrot.slane %v1264, 4
      %v1267 = vrot.slane %v570, 5
      %v1268 = vsel %vm1191, %v1266, %v1267
      %v1269 = vrot.slane %v571, 5
      %v1270 = vrot.slane %v1269, 4
      %v1271 = vrot.slane %v572, 5
      %v1272 = vsel %vm1191, %v1270, %v1271
      %v1273 = vrot.slane %v1271, 4
      %v1274 = vrot.slane %v573, 5
      %v1275 = vsel %vm1191, %v1273, %v1274
      %v1276 = vrot.slane %v574, 5
      %v1277 = vrot.slane %v1276, 4
      %v1278 = vrot.slane %v575, 5
      %v1279 = vsel %vm1191, %v1277, %v1278
      %v1280 = vrot.slane %v1278, 4
      %v1281 = vrot.slane %v576, 5
      %v1282 = vsel %vm1191, %v1280, %v1281
      %v1283 = vrot.slane %v577, 5
      %v1284 = vrot.slane %v1283, 4
      %v1285 = vrot.slane %v578, 5
      %v1286 = vsel %vm1191, %v1284, %v1285
      %v1287 = vrot.slane %v1285, 4
      %v1288 = vrot.slane %v579, 5
      %v1289 = vsel %vm1191, %v1287, %v1288
      %v1290 = vrot.slane %v580, 5
      %v1291 = vrot.slane %v1290, 4
      %v1292 = vrot.slane %v581, 5
      %v1293 = vsel %vm1191, %v1291, %v1292
      %v1294 = vrot.slane %v1292, 4
      %v1295 = vrot.slane %v582, 5
      %v1296 = vsel %vm1191, %v1294, %v1295
      %v1297 = vrot.slane %v583, 5
      %v1298 = vrot.slane %v1297, 4
      %v1299 = vrot.slane %v584, 5
      %v1300 = vsel %vm1191, %v1298, %v1299
      %v1301 = vrot.slane %v1299, 4
      %v1302 = vrot.slane %v585, 5
      %v1303 = vsel %vm1191, %v1301, %v1302
      %1304 = vrot.lane.b32.xlu0 %v1195, 8
      %v1305 = vpop.permute.xlu0 %1304
      %1306 = vrot.lane.b32.xlu0 %v1198, 8
      %v1307 = vpop.permute.xlu0 %1306
      %1308 = vrot.lane.b32.xlu0 %v1202, 8
      %v1309 = vpop.permute.xlu0 %1308
      %1310 = vrot.lane.b32.xlu0 %v1205, 8
      %v1311 = vpop.permute.xlu0 %1310
      %1312 = vrot.lane.b32.xlu0 %v1209, 8
      %v1313 = vpop.permute.xlu0 %1312
      %1314 = vrot.lane.b32.xlu0 %v1212, 8
      %v1315 = vpop.permute.xlu0 %1314
      %1316 = vrot.lane.b32.xlu0 %v1216, 8
      %v1317 = vpop.permute.xlu0 %1316
      %1318 = vrot.lane.b32.xlu0 %v1219, 8
      %v1319 = vpop.permute.xlu0 %1318
      %1320 = vrot.lane.b32.xlu0 %v1223, 8
      %v1321 = vpop.permute.xlu0 %1320
      %1322 = vrot.lane.b32.xlu0 %v1226, 8
      %v1323 = vpop.permute.xlu0 %1322
      %1324 = vrot.lane.b32.xlu0 %v1230, 8
      %v1325 = vpop.permute.xlu0 %1324
      %1326 = vrot.lane.b32.xlu0 %v1233, 8
      %v1327 = vpop.permute.xlu0 %1326
      %1328 = vrot.lane.b32.xlu0 %v1237, 8
      %v1329 = vpop.permute.xlu0 %1328
      %1330 = vrot.lane.b32.xlu0 %v1240, 8
      %v1331 = vpop.permute.xlu0 %1330
      %1332 = vrot.lane.b32.xlu0 %v1244, 8
      %v1333 = vpop.permute.xlu0 %1332
      %1334 = vrot.lane.b32.xlu0 %v1247, 8
      %v1335 = vpop.permute.xlu0 %1334
      %1336 = vrot.lane.b32.xlu0 %v1251, 8
      %v1337 = vpop.permute.xlu0 %1336
      %1338 = vrot.lane.b32.xlu0 %v1254, 8
      %v1339 = vpop.permute.xlu0 %1338
      %1340 = vrot.lane.b32.xlu0 %v1258, 8
      %v1341 = vpop.permute.xlu0 %1340
      %1342 = vrot.lane.b32.xlu0 %v1261, 8
      %v1343 = vpop.permute.xlu0 %1342
      %1344 = vrot.lane.b32.xlu0 %v1265, 8
      %v1345 = vpop.permute.xlu0 %1344
      %1346 = vrot.lane.b32.xlu0 %v1268, 8
      %v1347 = vpop.permute.xlu0 %1346
      %1348 = vrot.lane.b32.xlu0 %v1272, 8
      %v1349 = vpop.permute.xlu0 %1348
      %1350 = vrot.lane.b32.xlu0 %v1275, 8
      %v1351 = vpop.permute.xlu0 %1350
      %1352 = vrot.lane.b32.xlu0 %v1279, 8
      %v1353 = vpop.permute.xlu0 %1352
      %1354 = vrot.lane.b32.xlu0 %v1282, 8
      %v1355 = vpop.permute.xlu0 %1354
      %1356 = vrot.lane.b32.xlu0 %v1286, 8
      %v1357 = vpop.permute.xlu0 %1356
      %1358 = vrot.lane.b32.xlu0 %v1289, 8
      %v1359 = vpop.permute.xlu0 %1358
      %1360 = vrot.lane.b32.xlu0 %v1293, 8
      %v1361 = vpop.permute.xlu0 %1360
      %1362 = vrot.lane.b32.xlu0 %v1296, 8
      %v1363 = vpop.permute.xlu0 %1362
      %1364 = vrot.lane.b32.xlu0 %v1300, 8
      %v1365 = vpop.permute.xlu0 %1364
      %1366 = vrot.lane.b32.xlu0 %v1303, 8
      %v1367 = vpop.permute.xlu0 %1366
      %vm1400 = vcmask 93248
      %1401 = vst.msk [vmem:[#allocation3] sm:$0xf] %vm1400, %v1305
      %1402 = vst.msk [vmem:[#allocation3 + $0x4] sm:$0xf] %vm1400, %v1307
      %1403 = vst.msk [vmem:[#allocation3 + $0x8] sm:$0xf] %vm1400, %v1309
      %1404 = vst.msk [vmem:[#allocation3 + $0xc] sm:$0xf] %vm1400, %v1311
      %1405 = vst.msk [vmem:[#allocation3 + $0x10] sm:$0xf] %vm1400, %v1313
      %1406 = vst.msk [vmem:[#allocation3 + $0x14] sm:$0xf] %vm1400, %v1315
      %1407 = vst.msk [vmem:[#allocation3 + $0x18] sm:$0xf] %vm1400, %v1317
      %1408 = vst.msk [vmem:[#allocation3 + $0x1c] sm:$0xf] %vm1400, %v1319
      %1409 = vst.msk [vmem:[#allocation3 + $0x20] sm:$0xf] %vm1400, %v1321
      %1410 = vst.msk [vmem:[#allocation3 + $0x24] sm:$0xf] %vm1400, %v1323
      %1411 = vst.msk [vmem:[#allocation3 + $0x28] sm:$0xf] %vm1400, %v1325
      %1412 = vst.msk [vmem:[#allocation3 + $0x2c] sm:$0xf] %vm1400, %v1327
      %1413 = vst.msk [vmem:[#allocation3 + $0x30] sm:$0xf] %vm1400, %v1329
      %1414 = vst.msk [vmem:[#allocation3 + $0x34] sm:$0xf] %vm1400, %v1331
      %1415 = vst.msk [vmem:[#allocation3 + $0x38] sm:$0xf] %vm1400, %v1333
      %1416 = vst.msk [vmem:[#allocation3 + $0x3c] sm:$0xf] %vm1400, %v1335
      %1417 = vst.msk [vmem:[#allocation3 + $0x40] sm:$0xf] %vm1400, %v1337
      %1418 = vst.msk [vmem:[#allocation3 + $0x44] sm:$0xf] %vm1400, %v1339
      %1419 = vst.msk [vmem:[#allocation3 + $0x48] sm:$0xf] %vm1400, %v1341
      %1420 = vst.msk [vmem:[#allocation3 + $0x4c] sm:$0xf] %vm1400, %v1343
      %1421 = vst.msk [vmem:[#allocation3 + $0x50] sm:$0xf] %vm1400, %v1345
      %1422 = vst.msk [vmem:[#allocation3 + $0x54] sm:$0xf] %vm1400, %v1347
      %1423 = vst.msk [vmem:[#allocation3 + $0x58] sm:$0xf] %vm1400, %v1349
      %1424 = vst.msk [vmem:[#allocation3 + $0x5c] sm:$0xf] %vm1400, %v1351
      %1425 = vst.msk [vmem:[#allocation3 + $0x60] sm:$0xf] %vm1400, %v1353
      %1426 = vst.msk [vmem:[#allocation3 + $0x64] sm:$0xf] %vm1400, %v1355
      %1427 = vst.msk [vmem:[#allocation3 + $0x68] sm:$0xf] %vm1400, %v1357
      %1428 = vst.msk [vmem:[#allocation3 + $0x6c] sm:$0xf] %vm1400, %v1359
      %1429 = vst.msk [vmem:[#allocation3 + $0x70] sm:$0xf] %vm1400, %v1361
      %1430 = vst.msk [vmem:[#allocation3 + $0x74] sm:$0xf] %vm1400, %v1363
      %1431 = vst.msk [vmem:[#allocation3 + $0x78] sm:$0xf] %vm1400, %v1365
      %1432 = vst.msk [vmem:[#allocation3 + $0x7c] sm:$0xf] %vm1400, %v1367
      %1435 = vrot.lane.b32.xlu0 %v541, 12
      %v1436 = vpop.permute.xlu0 %1435
      %1437 = vrot.lane.b32.xlu0 %v542, 12
      %v1438 = vpop.permute.xlu0 %1437
      %1439 = vrot.lane.b32.xlu0 %v544, 12
      %v1440 = vpop.permute.xlu0 %1439
      %1441 = vrot.lane.b32.xlu0 %v545, 12
      %v1442 = vpop.permute.xlu0 %1441
      %1443 = vrot.lane.b32.xlu0 %v547, 12
      %v1444 = vpop.permute.xlu0 %1443
      %1445 = vrot.lane.b32.xlu0 %v548, 12
      %v1446 = vpop.permute.xlu0 %1445
      %1447 = vrot.lane.b32.xlu0 %v550, 12
      %v1448 = vpop.permute.xlu0 %1447
      %1449 = vrot.lane.b32.xlu0 %v551, 12
      %v1450 = vpop.permute.xlu0 %1449
      %1451 = vrot.lane.b32.xlu0 %v553, 12
      %v1452 = vpop.permute.xlu0 %1451
      %1453 = vrot.lane.b32.xlu0 %v554, 12
      %v1454 = vpop.permute.xlu0 %1453
      %1455 = vrot.lane.b32.xlu0 %v556, 12
      %v1456 = vpop.permute.xlu0 %1455
      %1457 = vrot.lane.b32.xlu0 %v557, 12
      %v1458 = vpop.permute.xlu0 %1457
      %1459 = vrot.lane.b32.xlu0 %v559, 12
      %v1460 = vpop.permute.xlu0 %1459
      %1461 = vrot.lane.b32.xlu0 %v560, 12
      %v1462 = vpop.permute.xlu0 %1461
      %1463 = vrot.lane.b32.xlu0 %v562, 12
      %v1464 = vpop.permute.xlu0 %1463
      %1465 = vrot.lane.b32.xlu0 %v563, 12
      %v1466 = vpop.permute.xlu0 %1465
      %1467 = vrot.lane.b32.xlu0 %v565, 12
      %v1468 = vpop.permute.xlu0 %1467
      %1469 = vrot.lane.b32.xlu0 %v566, 12
      %v1470 = vpop.permute.xlu0 %1469
      %1471 = vrot.lane.b32.xlu0 %v568, 12
      %v1472 = vpop.permute.xlu0 %1471
      %1473 = vrot.lane.b32.xlu0 %v569, 12
      %v1474 = vpop.permute.xlu0 %1473
      %1475 = vrot.lane.b32.xlu0 %v571, 12
      %v1476 = vpop.permute.xlu0 %1475
      %1477 = vrot.lane.b32.xlu0 %v572, 12
      %v1478 = vpop.permute.xlu0 %1477
      %1479 = vrot.lane.b32.xlu0 %v574, 12
      %v1480 = vpop.permute.xlu0 %1479
      %1481 = vrot.lane.b32.xlu0 %v575, 12
      %v1482 = vpop.permute.xlu0 %1481
      %1483 = vrot.lane.b32.xlu0 %v577, 12
      %v1484 = vpop.permute.xlu0 %1483
      %1485 = vrot.lane.b32.xlu0 %v578, 12
      %v1486 = vpop.permute.xlu0 %1485
      %1487 = vrot.lane.b32.xlu0 %v580, 12
      %v1488 = vpop.permute.xlu0 %1487
      %1489 = vrot.lane.b32.xlu0 %v581, 12
      %v1490 = vpop.permute.xlu0 %1489
      %1491 = vrot.lane.b32.xlu0 %v583, 12
      %v1492 = vpop.permute.xlu0 %1491
      %1493 = vrot.lane.b32.xlu0 %v584, 12
      %v1494 = vpop.permute.xlu0 %1493
      %1495 = vrot.lane.b32.xlu0 %v586, 12
      %v1496 = vpop.permute.xlu0 %1495
      %1497 = vrot.lane.b32.xlu0 %v587, 12
      %v1498 = vpop.permute.xlu0 %1497
      %vm1531 = vcmask 126048
      %1532 = vst.msk [vmem:[#allocation3] sm:$0xf] %vm1531, %v1436
      %1533 = vst.msk [vmem:[#allocation3 + $0x4] sm:$0xf] %vm1531, %v1438
      %1534 = vst.msk [vmem:[#allocation3 + $0x8] sm:$0xf] %vm1531, %v1440
      %1535 = vst.msk [vmem:[#allocation3 + $0xc] sm:$0xf] %vm1531, %v1442
      %1536 = vst.msk [vmem:[#allocation3 + $0x10] sm:$0xf] %vm1531, %v1444
      %1537 = vst.msk [vmem:[#allocation3 + $0x14] sm:$0xf] %vm1531, %v1446
      %1538 = vst.msk [vmem:[#allocation3 + $0x18] sm:$0xf] %vm1531, %v1448
      %1539 = vst.msk [vmem:[#allocation3 + $0x1c] sm:$0xf] %vm1531, %v1450
      %1540 = vst.msk [vmem:[#allocation3 + $0x20] sm:$0xf] %vm1531, %v1452
      %1541 = vst.msk [vmem:[#allocation3 + $0x24] sm:$0xf] %vm1531, %v1454
      %1542 = vst.msk [vmem:[#allocation3 + $0x28] sm:$0xf] %vm1531, %v1456
      %1543 = vst.msk [vmem:[#allocation3 + $0x2c] sm:$0xf] %vm1531, %v1458
      %1544 = vst.msk [vmem:[#allocation3 + $0x30] sm:$0xf] %vm1531, %v1460
      %1545 = vst.msk [vmem:[#allocation3 + $0x34] sm:$0xf] %vm1531, %v1462
      %1546 = vst.msk [vmem:[#allocation3 + $0x38] sm:$0xf] %vm1531, %v1464
      %1547 = vst.msk [vmem:[#allocation3 + $0x3c] sm:$0xf] %vm1531, %v1466
      %1548 = vst.msk [vmem:[#allocation3 + $0x40] sm:$0xf] %vm1531, %v1468
      %1549 = vst.msk [vmem:[#allocation3 + $0x44] sm:$0xf] %vm1531, %v1470
      %1550 = vst.msk [vmem:[#allocation3 + $0x48] sm:$0xf] %vm1531, %v1472
      %1551 = vst.msk [vmem:[#allocation3 + $0x4c] sm:$0xf] %vm1531, %v1474
      %1552 = vst.msk [vmem:[#allocation3 + $0x50] sm:$0xf] %vm1531, %v1476
      %1553 = vst.msk [vmem:[#allocation3 + $0x54] sm:$0xf] %vm1531, %v1478
      %1554 = vst.msk [vmem:[#allocation3 + $0x58] sm:$0xf] %vm1531, %v1480
      %1555 = vst.msk [vmem:[#allocation3 + $0x5c] sm:$0xf] %vm1531, %v1482
      %1556 = vst.msk [vmem:[#allocation3 + $0x60] sm:$0xf] %vm1531, %v1484
      %1557 = vst.msk [vmem:[#allocation3 + $0x64] sm:$0xf] %vm1531, %v1486
      %1558 = vst.msk [vmem:[#allocation3 + $0x68] sm:$0xf] %vm1531, %v1488
      %1559 = vst.msk [vmem:[#allocation3 + $0x6c] sm:$0xf] %vm1531, %v1490
      %1560 = vst.msk [vmem:[#allocation3 + $0x70] sm:$0xf] %vm1531, %v1492
      %1561 = vst.msk [vmem:[#allocation3 + $0x74] sm:$0xf] %vm1531, %v1494
      %1562 = vst.msk [vmem:[#allocation3 + $0x78] sm:$0xf] %vm1531, %v1496
      %1563 = vst.msk [vmem:[#allocation3 + $0x7c] sm:$0xf] %vm1531, %v1498
      %v1565 = vshrl.u32 %v586, 16
      %v1567 = vrot.slane %v1565, 4
      %v1568 = vshll.u32 %v586, 16
      %v1570 = vrot.slane %v1568, 5
      %v1571 = vor.u32 %v1567, %v1570
      %v1572 = vrot.slane %v1571, 4
      %v1574 = vshll.u32 %v587, 16
      %v1576 = vrot.slane %v1574, 5
      %v1577 = vsel %vm627, %v1572, %v1576
      %v1578 = vshrl.u32 %v587, 16
      %v1580 = vrot.slane %v1578, 4
      %v1581 = vor.u32 %v1580, %v1576
      %v1582 = vrot.slane %v1581, 4
      %v1584 = vshll.u32 %v588, 16
      %v1586 = vrot.slane %v1584, 5
      %v1587 = vsel %vm627, %v1582, %v1586
      %1588 = vrot.lane.b32.xlu0 %v665, 16
      %v1589 = vpop.permute.xlu0 %1588
      %1590 = vrot.lane.b32.xlu0 %v675, 16
      %v1591 = vpop.permute.xlu0 %1590
      %1592 = vrot.lane.b32.xlu0 %v689, 16
      %v1593 = vpop.permute.xlu0 %1592
      %1594 = vrot.lane.b32.xlu0 %v699, 16
      %v1595 = vpop.permute.xlu0 %1594
      %1596 = vrot.lane.b32.xlu0 %v713, 16
      %v1597 = vpop.permute.xlu0 %1596
      %1598 = vrot.lane.b32.xlu0 %v723, 16
      %v1599 = vpop.permute.xlu0 %1598
      %1600 = vrot.lane.b32.xlu0 %v737, 16
      %v1601 = vpop.permute.xlu0 %1600
      %1602 = vrot.lane.b32.xlu0 %v747, 16
      %v1603 = vpop.permute.xlu0 %1602
      %1604 = vrot.lane.b32.xlu0 %v761, 16
      %v1605 = vpop.permute.xlu0 %1604
      %1606 = vrot.lane.b32.xlu0 %v771, 16
      %v1607 = vpop.permute.xlu0 %1606
      %1608 = vrot.lane.b32.xlu0 %v785, 16
      %v1609 = vpop.permute.xlu0 %1608
      %1610 = vrot.lane.b32.xlu0 %v795, 16
      %v1611 = vpop.permute.xlu0 %1610
      %1612 = vrot.lane.b32.xlu0 %v809, 16
      %v1613 = vpop.permute.xlu0 %1612
      %1614 = vrot.lane.b32.xlu0 %v819, 16
      %v1615 = vpop.permute.xlu0 %1614
      %1616 = vrot.lane.b32.xlu0 %v833, 16
      %v1617 = vpop.permute.xlu0 %1616
      %1618 = vrot.lane.b32.xlu0 %v843, 16
      %v1619 = vpop.permute.xlu0 %1618
      %1620 = vrot.lane.b32.xlu0 %v857, 16
      %v1621 = vpop.permute.xlu0 %1620
      %1622 = vrot.lane.b32.xlu0 %v867, 16
      %v1623 = vpop.permute.xlu0 %1622
      %1624 = vrot.lane.b32.xlu0 %v881, 16
      %v1625 = vpop.permute.xlu0 %1624
      %1626 = vrot.lane.b32.xlu0 %v891, 16
      %v1627 = vpop.permute.xlu0 %1626
      %1628 = vrot.lane.b32.xlu0 %v905, 16
      %v1629 = vpop.permute.xlu0 %1628
      %1630 = vrot.lane.b32.xlu0 %v915, 16
      %v1631 = vpop.permute.xlu0 %1630
      %1632 = vrot.lane.b32.xlu0 %v929, 16
      %v1633 = vpop.permute.xlu0 %1632
      %1634 = vrot.lane.b32.xlu0 %v939, 16
      %v1635 = vpop.permute.xlu0 %1634
      %1636 = vrot.lane.b32.xlu0 %v953, 16
      %v1637 = vpop.permute.xlu0 %1636
      %1638 = vrot.lane.b32.xlu0 %v963, 16
      %v1639 = vpop.permute.xlu0 %1638
      %1640 = vrot.lane.b32.xlu0 %v977, 16
      %v1641 = vpop.permute.xlu0 %1640
      %1642 = vrot.lane.b32.xlu0 %v987, 16
      %v1643 = vpop.permute.xlu0 %1642
      %1644 = vrot.lane.b32.xlu0 %v1001, 16
      %v1645 = vpop.permute.xlu0 %1644
      %1646 = vrot.lane.b32.xlu0 %v1011, 16
      %v1647 = vpop.permute.xlu0 %1646
      %1648 = vrot.lane.b32.xlu0 %v1577, 16
      %v1649 = vpop.permute.xlu0 %1648
      %1650 = vrot.lane.b32.xlu0 %v1587, 16
      %v1651 = vpop.permute.xlu0 %1650
      %vm1684 = vcmask 158848
      %1685 = vst.msk [vmem:[#allocation3] sm:$0xf] %vm1684, %v1589
      %1686 = vst.msk [vmem:[#allocation3 + $0x4] sm:$0xf] %vm1684, %v1591
      %1687 = vst.msk [vmem:[#allocation3 + $0x8] sm:$0xf] %vm1684, %v1593
      %1688 = vst.msk [vmem:[#allocation3 + $0xc] sm:$0xf] %vm1684, %v1595
      %1689 = vst.msk [vmem:[#allocation3 + $0x10] sm:$0xf] %vm1684, %v1597
      %1690 = vst.msk [vmem:[#allocation3 + $0x14] sm:$0xf] %vm1684, %v1599
      %1691 = vst.msk [vmem:[#allocation3 + $0x18] sm:$0xf] %vm1684, %v1601
      %1692 = vst.msk [vmem:[#allocation3 + $0x1c] sm:$0xf] %vm1684, %v1603
      %1693 = vst.msk [vmem:[#allocation3 + $0x20] sm:$0xf] %vm1684, %v1605
      %1694 = vst.msk [vmem:[#allocation3 + $0x24] sm:$0xf] %vm1684, %v1607
      %1695 = vst.msk [vmem:[#allocation3 + $0x28] sm:$0xf] %vm1684, %v1609
      %1696 = vst.msk [vmem:[#allocation3 + $0x2c] sm:$0xf] %vm1684, %v1611
      %1697 = vst.msk [vmem:[#allocation3 + $0x30] sm:$0xf] %vm1684, %v1613
      %1698 = vst.msk [vmem:[#allocation3 + $0x34] sm:$0xf] %vm1684, %v1615
      %1699 = vst.msk [vmem:[#allocation3 + $0x38] sm:$0xf] %vm1684, %v1617
      %1700 = vst.msk [vmem:[#allocation3 + $0x3c] sm:$0xf] %vm1684, %v1619
      %1701 = vst.msk [vmem:[#allocation3 + $0x40] sm:$0xf] %vm1684, %v1621
      %1702 = vst.msk [vmem:[#allocation3 + $0x44] sm:$0xf] %vm1684, %v1623
      %1703 = vst.msk [vmem:[#allocation3 + $0x48] sm:$0xf] %vm1684, %v1625
      %1704 = vst.msk [vmem:[#allocation3 + $0x4c] sm:$0xf] %vm1684, %v1627
      %1705 = vst.msk [vmem:[#allocation3 + $0x50] sm:$0xf] %vm1684, %v1629
      %1706 = vst.msk [vmem:[#allocation3 + $0x54] sm:$0xf] %vm1684, %v1631
      %1707 = vst.msk [vmem:[#allocation3 + $0x58] sm:$0xf] %vm1684, %v1633
      %1708 = vst.msk [vmem:[#allocation3 + $0x5c] sm:$0xf] %vm1684, %v1635
      %1709 = vst.msk [vmem:[#allocation3 + $0x60] sm:$0xf] %vm1684, %v1637
      %1710 = vst.msk [vmem:[#allocation3 + $0x64] sm:$0xf] %vm1684, %v1639
      %1711 = vst.msk [vmem:[#allocation3 + $0x68] sm:$0xf] %vm1684, %v1641
      %1712 = vst.msk [vmem:[#allocation3 + $0x6c] sm:$0xf] %vm1684, %v1643
      %1713 = vst.msk [vmem:[#allocation3 + $0x70] sm:$0xf] %vm1684, %v1645
      %1714 = vst.msk [vmem:[#allocation3 + $0x74] sm:$0xf] %vm1684, %v1647
      %1715 = vst.msk [vmem:[#allocation3 + $0x78] sm:$0xf] %vm1684, %v1649
      %1716 = vst.msk [vmem:[#allocation3 + $0x7c] sm:$0xf] %vm1684, %v1651
      %v1718 = vrot.slane %v586, 5
      %v1719 = vrot.slane %v1718, 4
      %v1720 = vrot.slane %v587, 5
      %v1721 = vsel %vm1191, %v1719, %v1720
      %v1722 = vrot.slane %v1720, 4
      %v1723 = vrot.slane %v588, 5
      %v1724 = vsel %vm1191, %v1722, %v1723
      %1725 = vrot.lane.b32.xlu0 %v1202, 20
      %v1726 = vpop.permute.xlu0 %1725
      %1727 = vrot.lane.b32.xlu0 %v1205, 20
      %v1728 = vpop.permute.xlu0 %1727
      %1729 = vrot.lane.b32.xlu0 %v1209, 20
      %v1730 = vpop.permute.xlu0 %1729
      %1731 = vrot.lane.b32.xlu0 %v1212, 20
      %v1732 = vpop.permute.xlu0 %1731
      %1733 = vrot.lane.b32.xlu0 %v1216, 20
      %v1734 = vpop.permute.xlu0 %1733
      %1735 = vrot.lane.b32.xlu0 %v1219, 20
      %v1736 = vpop.permute.xlu0 %1735
      %1737 = vrot.lane.b32.xlu0 %v1223, 20
      %v1738 = vpop.permute.xlu0 %1737
      %1739 = vrot.lane.b32.xlu0 %v1226, 20
      %v1740 = vpop.permute.xlu0 %1739
      %1741 = vrot.lane.b32.xlu0 %v1230, 20
      %v1742 = vpop.permute.xlu0 %1741
      %1743 = vrot.lane.b32.xlu0 %v1233, 20
      %v1744 = vpop.permute.xlu0 %1743
      %1745 = vrot.lane.b32.xlu0 %v1237, 20
      %v1746 = vpop.permute.xlu0 %1745
      %1747 = vrot.lane.b32.xlu0 %v1240, 20
      %v1748 = vpop.permute.xlu0 %1747
      %1749 = vrot.lane.b32.xlu0 %v1244, 20
      %v1750 = vpop.permute.xlu0 %1749
      %1751 = vrot.lane.b32.xlu0 %v1247, 20
      %v1752 = vpop.permute.xlu0 %1751
      %1753 = vrot.lane.b32.xlu0 %v1251, 20
      %v1754 = vpop.permute.xlu0 %1753
      %1755 = vrot.lane.b32.xlu0 %v1254, 20
      %v1756 = vpop.permute.xlu0 %1755
      %1757 = vrot.lane.b32.xlu0 %v1258, 20
      %v1758 = vpop.permute.xlu0 %1757
      %1759 = vrot.lane.b32.xlu0 %v1261, 20
      %v1760 = vpop.permute.xlu0 %1759
      %1761 = vrot.lane.b32.xlu0 %v1265, 20
      %v1762 = vpop.permute.xlu0 %1761
      %1763 = vrot.lane.b32.xlu0 %v1268, 20
      %v1764 = vpop.permute.xlu0 %1763
      %1765 = vrot.lane.b32.xlu0 %v1272, 20
      %v1766 = vpop.permute.xlu0 %1765
      %1767 = vrot.lane.b32.xlu0 %v1275, 20
      %v1768 = vpop.permute.xlu0 %1767
      %1769 = vrot.lane.b32.xlu0 %v1279, 20
      %v1770 = vpop.permute.xlu0 %1769
      %1771 = vrot.lane.b32.xlu0 %v1282, 20
      %v1772 = vpop.permute.xlu0 %1771
      %1773 = vrot.lane.b32.xlu0 %v1286, 20
      %v1774 = vpop.permute.xlu0 %1773
      %1775 = vrot.lane.b32.xlu0 %v1289, 20
      %v1776 = vpop.permute.xlu0 %1775
      %1777 = vrot.lane.b32.xlu0 %v1293, 20
      %v1778 = vpop.permute.xlu0 %1777
      %1779 = vrot.lane.b32.xlu0 %v1296, 20
      %v1780 = vpop.permute.xlu0 %1779
      %1781 = vrot.lane.b32.xlu0 %v1300, 20
      %v1782 = vpop.permute.xlu0 %1781
      %1783 = vrot.lane.b32.xlu0 %v1303, 20
      %v1784 = vpop.permute.xlu0 %1783
      %1785 = vrot.lane.b32.xlu0 %v1721, 20
      %v1786 = vpop.permute.xlu0 %1785
      %1787 = vrot.lane.b32.xlu0 %v1724, 20
      %v1788 = vpop.permute.xlu0 %1787
      %vm1821 = vcmask 191648
      %1822 = vst.msk [vmem:[#allocation3] sm:$0xf] %vm1821, %v1726
      %1823 = vst.msk [vmem:[#allocation3 + $0x4] sm:$0xf] %vm1821, %v1728
      %1824 = vst.msk [vmem:[#allocation3 + $0x8] sm:$0xf] %vm1821, %v1730
      %1825 = vst.msk [vmem:[#allocation3 + $0xc] sm:$0xf] %vm1821, %v1732
      %1826 = vst.msk [vmem:[#allocation3 + $0x10] sm:$0xf] %vm1821, %v1734
      %1827 = vst.msk [vmem:[#allocation3 + $0x14] sm:$0xf] %vm1821, %v1736
      %1828 = vst.msk [vmem:[#allocation3 + $0x18] sm:$0xf] %vm1821, %v1738
      %1829 = vst.msk [vmem:[#allocation3 + $0x1c] sm:$0xf] %vm1821, %v1740
      %1830 = vst.msk [vmem:[#allocation3 + $0x20] sm:$0xf] %vm1821, %v1742
      %1831 = vst.msk [vmem:[#allocation3 + $0x24] sm:$0xf] %vm1821, %v1744
      %1832 = vst.msk [vmem:[#allocation3 + $0x28] sm:$0xf] %vm1821, %v1746
      %1833 = vst.msk [vmem:[#allocation3 + $0x2c] sm:$0xf] %vm1821, %v1748
      %1834 = vst.msk [vmem:[#allocation3 + $0x30] sm:$0xf] %vm1821, %v1750
      %1835 = vst.msk [vmem:[#allocation3 + $0x34] sm:$0xf] %vm1821, %v1752
      %1836 = vst.msk [vmem:[#allocation3 + $0x38] sm:$0xf] %vm1821, %v1754
      %1837 = vst.msk [vmem:[#allocation3 + $0x3c] sm:$0xf] %vm1821, %v1756
      %1838 = vst.msk [vmem:[#allocation3 + $0x40] sm:$0xf] %vm1821, %v1758
      %1839 = vst.msk [vmem:[#allocation3 + $0x44] sm:$0xf] %vm1821, %v1760
      %1840 = vst.msk [vmem:[#allocation3 + $0x48] sm:$0xf] %vm1821, %v1762
      %1841 = vst.msk [vmem:[#allocation3 + $0x4c] sm:$0xf] %vm1821, %v1764
      %1842 = vst.msk [vmem:[#allocation3 + $0x50] sm:$0xf] %vm1821, %v1766
      %1843 = vst.msk [vmem:[#allocation3 + $0x54] sm:$0xf] %vm1821, %v1768
      %1844 = vst.msk [vmem:[#allocation3 + $0x58] sm:$0xf] %vm1821, %v1770
      %1845 = vst.msk [vmem:[#allocation3 + $0x5c] sm:$0xf] %vm1821, %v1772
      %1846 = vst.msk [vmem:[#allocation3 + $0x60] sm:$0xf] %vm1821, %v1774
      %1847 = vst.msk [vmem:[#allocation3 + $0x64] sm:$0xf] %vm1821, %v1776
      %1848 = vst.msk [vmem:[#allocation3 + $0x68] sm:$0xf] %vm1821, %v1778
      %1849 = vst.msk [vmem:[#allocation3 + $0x6c] sm:$0xf] %vm1821, %v1780
      %1850 = vst.msk [vmem:[#allocation3 + $0x70] sm:$0xf] %vm1821, %v1782
      %1851 = vst.msk [vmem:[#allocation3 + $0x74] sm:$0xf] %vm1821, %v1784
      %1852 = vst.msk [vmem:[#allocation3 + $0x78] sm:$0xf] %vm1821, %v1786
      %1853 = vst.msk [vmem:[#allocation3 + $0x7c] sm:$0xf] %vm1821, %v1788
      %1856 = vrot.lane.b32.xlu0 %v544, 24
      %v1857 = vpop.permute.xlu0 %1856
      %1858 = vrot.lane.b32.xlu0 %v545, 24
      %v1859 = vpop.permute.xlu0 %1858
      %1860 = vrot.lane.b32.xlu0 %v547, 24
      %v1861 = vpop.permute.xlu0 %1860
      %1862 = vrot.lane.b32.xlu0 %v548, 24
      %v1863 = vpop.permute.xlu0 %1862
      %1864 = vrot.lane.b32.xlu0 %v550, 24
      %v1865 = vpop.permute.xlu0 %1864
      %1866 = vrot.lane.b32.xlu0 %v551, 24
      %v1867 = vpop.permute.xlu0 %1866
      %1868 = vrot.lane.b32.xlu0 %v553, 24
      %v1869 = vpop.permute.xlu0 %1868
      %1870 = vrot.lane.b32.xlu0 %v554, 24
      %v1871 = vpop.permute.xlu0 %1870
      %1872 = vrot.lane.b32.xlu0 %v556, 24
      %v1873 = vpop.permute.xlu0 %1872
      %1874 = vrot.lane.b32.xlu0 %v557, 24
      %v1875 = vpop.permute.xlu0 %1874
      %1876 = vrot.lane.b32.xlu0 %v559, 24
      %v1877 = vpop.permute.xlu0 %1876
      %1878 = vrot.lane.b32.xlu0 %v560, 24
      %v1879 = vpop.permute.xlu0 %1878
      %1880 = vrot.lane.b32.xlu0 %v562, 24
      %v1881 = vpop.permute.xlu0 %1880
      %1882 = vrot.lane.b32.xlu0 %v563, 24
      %v1883 = vpop.permute.xlu0 %1882
      %1884 = vrot.lane.b32.xlu0 %v565, 24
      %v1885 = vpop.permute.xlu0 %1884
      %1886 = vrot.lane.b32.xlu0 %v566, 24
      %v1887 = vpop.permute.xlu0 %1886
      %1888 = vrot.lane.b32.xlu0 %v568, 24
      %v1889 = vpop.permute.xlu0 %1888
      %1890 = vrot.lane.b32.xlu0 %v569, 24
      %v1891 = vpop.permute.xlu0 %1890
      %1892 = vrot.lane.b32.xlu0 %v571, 24
      %v1893 = vpop.permute.xlu0 %1892
      %1894 = vrot.lane.b32.xlu0 %v572, 24
      %v1895 = vpop.permute.xlu0 %1894
      %1896 = vrot.lane.b32.xlu0 %v574, 24
      %v1897 = vpop.permute.xlu0 %1896
      %1898 = vrot.lane.b32.xlu0 %v575, 24
      %v1899 = vpop.permute.xlu0 %1898
      %1900 = vrot.lane.b32.xlu0 %v577, 24
      %v1901 = vpop.permute.xlu0 %1900
      %1902 = vrot.lane.b32.xlu0 %v578, 24
      %v1903 = vpop.permute.xlu0 %1902
      %1904 = vrot.lane.b32.xlu0 %v580, 24
      %v1905 = vpop.permute.xlu0 %1904
      %1906 = vrot.lane.b32.xlu0 %v581, 24
      %v1907 = vpop.permute.xlu0 %1906
      %1908 = vrot.lane.b32.xlu0 %v583, 24
      %v1909 = vpop.permute.xlu0 %1908
      %1910 = vrot.lane.b32.xlu0 %v584, 24
      %v1911 = vpop.permute.xlu0 %1910
      %1912 = vrot.lane.b32.xlu0 %v586, 24
      %v1913 = vpop.permute.xlu0 %1912
      %1914 = vrot.lane.b32.xlu0 %v587, 24
      %v1915 = vpop.permute.xlu0 %1914
      %1916 = vrot.lane.b32.xlu0 %v589, 24
      %v1917 = vpop.permute.xlu0 %1916
      %1918 = vrot.lane.b32.xlu0 %v590, 24
      %v1919 = vpop.permute.xlu0 %1918
      %vm1952 = vcmask 224448
      %1953 = vst.msk [vmem:[#allocation3] sm:$0xf] %vm1952, %v1857
      %1954 = vst.msk [vmem:[#allocation3 + $0x4] sm:$0xf] %vm1952, %v1859
      %1955 = vst.msk [vmem:[#allocation3 + $0x8] sm:$0xf] %vm1952, %v1861
      %1956 = vst.msk [vmem:[#allocation3 + $0xc] sm:$0xf] %vm1952, %v1863
      %1957 = vst.msk [vmem:[#allocation3 + $0x10] sm:$0xf] %vm1952, %v1865
      %1958 = vst.msk [vmem:[#allocation3 + $0x14] sm:$0xf] %vm1952, %v1867
      %1959 = vst.msk [vmem:[#allocation3 + $0x18] sm:$0xf] %vm1952, %v1869
      %1960 = vst.msk [vmem:[#allocation3 + $0x1c] sm:$0xf] %vm1952, %v1871
      %1961 = vst.msk [vmem:[#allocation3 + $0x20] sm:$0xf] %vm1952, %v1873
      %1962 = vst.msk [vmem:[#allocation3 + $0x24] sm:$0xf] %vm1952, %v1875
      %1963 = vst.msk [vmem:[#allocation3 + $0x28] sm:$0xf] %vm1952, %v1877
      %1964 = vst.msk [vmem:[#allocation3 + $0x2c] sm:$0xf] %vm1952, %v1879
      %1965 = vst.msk [vmem:[#allocation3 + $0x30] sm:$0xf] %vm1952, %v1881
      %1966 = vst.msk [vmem:[#allocation3 + $0x34] sm:$0xf] %vm1952, %v1883
      %1967 = vst.msk [vmem:[#allocation3 + $0x38] sm:$0xf] %vm1952, %v1885
      %1968 = vst.msk [vmem:[#allocation3 + $0x3c] sm:$0xf] %vm1952, %v1887
      %1969 = vst.msk [vmem:[#allocation3 + $0x40] sm:$0xf] %vm1952, %v1889
      %1970 = vst.msk [vmem:[#allocation3 + $0x44] sm:$0xf] %vm1952, %v1891
      %1971 = vst.msk [vmem:[#allocation3 + $0x48] sm:$0xf] %vm1952, %v1893
      %1972 = vst.msk [vmem:[#allocation3 + $0x4c] sm:$0xf] %vm1952, %v1895
      %1973 = vst.msk [vmem:[#allocation3 + $0x50] sm:$0xf] %vm1952, %v1897
      %1974 = vst.msk [vmem:[#allocation3 + $0x54] sm:$0xf] %vm1952, %v1899
      %1975 = vst.msk [vmem:[#allocation3 + $0x58] sm:$0xf] %vm1952, %v1901
      %1976 = vst.msk [vmem:[#allocation3 + $0x5c] sm:$0xf] %vm1952, %v1903
      %1977 = vst.msk [vmem:[#allocation3 + $0x60] sm:$0xf] %vm1952, %v1905
      %1978 = vst.msk [vmem:[#allocation3 + $0x64] sm:$0xf] %vm1952, %v1907
      %1979 = vst.msk [vmem:[#allocation3 + $0x68] sm:$0xf] %vm1952, %v1909
      %1980 = vst.msk [vmem:[#allocation3 + $0x6c] sm:$0xf] %vm1952, %v1911
      %1981 = vst.msk [vmem:[#allocation3 + $0x70] sm:$0xf] %vm1952, %v1913
      %1982 = vst.msk [vmem:[#allocation3 + $0x74] sm:$0xf] %vm1952, %v1915
      %1983 = vst.msk [vmem:[#allocation3 + $0x78] sm:$0xf] %vm1952, %v1917
      %1984 = vst.msk [vmem:[#allocation3 + $0x7c] sm:$0xf] %vm1952, %v1919
      %v1986 = vshrl.u32 %v589, 16
      %v1988 = vrot.slane %v1986, 4
      %v1989 = vshll.u32 %v589, 16
      %v1991 = vrot.slane %v1989, 5
      %v1992 = vor.u32 %v1988, %v1991
      %v1993 = vrot.slane %v1992, 4
      %v1995 = vshll.u32 %v590, 16
      %v1997 = vrot.slane %v1995, 5
      %v1998 = vsel %vm627, %v1993, %v1997
      %v1999 = vshrl.u32 %v590, 16
      %v2001 = vrot.slane %v1999, 4
      %v2002 = vor.u32 %v2001, %v1997
      %v2003 = vrot.slane %v2002, 4
      %v2005 = vshll.u32 %v591, 16
      %v2007 = vrot.slane %v2005, 5
      %v2008 = vsel %vm627, %v2003, %v2007
      %2009 = vrot.lane.b32.xlu0 %v689, 28
      %v2010 = vpop.permute.xlu0 %2009
      %2011 = vrot.lane.b32.xlu0 %v699, 28
      %v2012 = vpop.permute.xlu0 %2011
      %2013 = vrot.lane.b32.xlu0 %v713, 28
      %v2014 = vpop.permute.xlu0 %2013
      %2015 = vrot.lane.b32.xlu0 %v723, 28
      %v2016 = vpop.permute.xlu0 %2015
      %2017 = vrot.lane.b32.xlu0 %v737, 28
      %v2018 = vpop.permute.xlu0 %2017
      %2019 = vrot.lane.b32.xlu0 %v747, 28
      %v2020 = vpop.permute.xlu0 %2019
      %2021 = vrot.lane.b32.xlu0 %v761, 28
      %v2022 = vpop.permute.xlu0 %2021
      %2023 = vrot.lane.b32.xlu0 %v771, 28
      %v2024 = vpop.permute.xlu0 %2023
      %2025 = vrot.lane.b32.xlu0 %v785, 28
      %v2026 = vpop.permute.xlu0 %2025
      %2027 = vrot.lane.b32.xlu0 %v795, 28
      %v2028 = vpop.permute.xlu0 %2027
      %2029 = vrot.lane.b32.xlu0 %v809, 28
      %v2030 = vpop.permute.xlu0 %2029
      %2031 = vrot.lane.b32.xlu0 %v819, 28
      %v2032 = vpop.permute.xlu0 %2031
      %2033 = vrot.lane.b32.xlu0 %v833, 28
      %v2034 = vpop.permute.xlu0 %2033
      %2035 = vrot.lane.b32.xlu0 %v843, 28
      %v2036 = vpop.permute.xlu0 %2035
      %2037 = vrot.lane.b32.xlu0 %v857, 28
      %v2038 = vpop.permute.xlu0 %2037
      %2039 = vrot.lane.b32.xlu0 %v867, 28
      %v2040 = vpop.permute.xlu0 %2039
      %2041 = vrot.lane.b32.xlu0 %v881, 28
      %v2042 = vpop.permute.xlu0 %2041
      %2043 = vrot.lane.b32.xlu0 %v891, 28
      %v2044 = vpop.permute.xlu0 %2043
      %2045 = vrot.lane.b32.xlu0 %v905, 28
      %v2046 = vpop.permute.xlu0 %2045
      %2047 = vrot.lane.b32.xlu0 %v915, 28
      %v2048 = vpop.permute.xlu0 %2047
      %2049 = vrot.lane.b32.xlu0 %v929, 28
      %v2050 = vpop.permute.xlu0 %2049
      %2051 = vrot.lane.b32.xlu0 %v939, 28
      %v2052 = vpop.permute.xlu0 %2051
      %2053 = vrot.lane.b32.xlu0 %v953, 28
      %v2054 = vpop.permute.xlu0 %2053
      %2055 = vrot.lane.b32.xlu0 %v963, 28
      %v2056 = vpop.permute.xlu0 %2055
      %2057 = vrot.lane.b32.xlu0 %v977, 28
      %v2058 = vpop.permute.xlu0 %2057
      %2059 = vrot.lane.b32.xlu0 %v987, 28
      %v2060 = vpop.permute.xlu0 %2059
      %2061 = vrot.lane.b32.xlu0 %v1001, 28
      %v2062 = vpop.permute.xlu0 %2061
      %2063 = vrot.lane.b32.xlu0 %v1011, 28
      %v2064 = vpop.permute.xlu0 %2063
      %2065 = vrot.lane.b32.xlu0 %v1577, 28
      %v2066 = vpop.permute.xlu0 %2065
      %2067 = vrot.lane.b32.xlu0 %v1587, 28
      %v2068 = vpop.permute.xlu0 %2067
      %2069 = vrot.lane.b32.xlu0 %v1998, 28
      %v2070 = vpop.permute.xlu0 %2069
      %2071 = vrot.lane.b32.xlu0 %v2008, 28
      %v2072 = vpop.permute.xlu0 %2071
      %vm2105 = vcmask 257248
      %2106 = vst.msk [vmem:[#allocation3] sm:$0xf] %vm2105, %v2010
      %2107 = vst.msk [vmem:[#allocation3 + $0x4] sm:$0xf] %vm2105, %v2012
      %2108 = vst.msk [vmem:[#allocation3 + $0x8] sm:$0xf] %vm2105, %v2014
      %2109 = vst.msk [vmem:[#allocation3 + $0xc] sm:$0xf] %vm2105, %v2016
      %2110 = vst.msk [vmem:[#allocation3 + $0x10] sm:$0xf] %vm2105, %v2018
      %2111 = vst.msk [vmem:[#allocation3 + $0x14] sm:$0xf] %vm2105, %v2020
      %2112 = vst.msk [vmem:[#allocation3 + $0x18] sm:$0xf] %vm2105, %v2022
      %2113 = vst.msk [vmem:[#allocation3 + $0x1c] sm:$0xf] %vm2105, %v2024
      %2114 = vst.msk [vmem:[#allocation3 + $0x20] sm:$0xf] %vm2105, %v2026
      %2115 = vst.msk [vmem:[#allocation3 + $0x24] sm:$0xf] %vm2105, %v2028
      %2116 = vst.msk [vmem:[#allocation3 + $0x28] sm:$0xf] %vm2105, %v2030
      %2117 = vst.msk [vmem:[#allocation3 + $0x2c] sm:$0xf] %vm2105, %v2032
      %2118 = vst.msk [vmem:[#allocation3 + $0x30] sm:$0xf] %vm2105, %v2034
      %2119 = vst.msk [vmem:[#allocation3 + $0x34] sm:$0xf] %vm2105, %v2036
      %2120 = vst.msk [vmem:[#allocation3 + $0x38] sm:$0xf] %vm2105, %v2038
      %2121 = vst.msk [vmem:[#allocation3 + $0x3c] sm:$0xf] %vm2105, %v2040
      %2122 = vst.msk [vmem:[#allocation3 + $0x40] sm:$0xf] %vm2105, %v2042
      %2123 = vst.msk [vmem:[#allocation3 + $0x44] sm:$0xf] %vm2105, %v2044
      %2124 = vst.msk [vmem:[#allocation3 + $0x48] sm:$0xf] %vm2105, %v2046
      %2125 = vst.msk [vmem:[#allocation3 + $0x4c] sm:$0xf] %vm2105, %v2048
      %2126 = vst.msk [vmem:[#allocation3 + $0x50] sm:$0xf] %vm2105, %v2050
      %2127 = vst.msk [vmem:[#allocation3 + $0x54] sm:$0xf] %vm2105, %v2052
      %2128 = vst.msk [vmem:[#allocation3 + $0x58] sm:$0xf] %vm2105, %v2054
      %2129 = vst.msk [vmem:[#allocation3 + $0x5c] sm:$0xf] %vm2105, %v2056
      %2130 = vst.msk [vmem:[#allocation3 + $0x60] sm:$0xf] %vm2105, %v2058
      %2131 = vst.msk [vmem:[#allocation3 + $0x64] sm:$0xf] %vm2105, %v2060
      %2132 = vst.msk [vmem:[#allocation3 + $0x68] sm:$0xf] %vm2105, %v2062
      %2133 = vst.msk [vmem:[#allocation3 + $0x6c] sm:$0xf] %vm2105, %v2064
      %2134 = vst.msk [vmem:[#allocation3 + $0x70] sm:$0xf] %vm2105, %v2066
      %2135 = vst.msk [vmem:[#allocation3 + $0x74] sm:$0xf] %vm2105, %v2068
      %2136 = vst.msk [vmem:[#allocation3 + $0x78] sm:$0xf] %vm2105, %v2070
      %2137 = vst.msk [vmem:[#allocation3 + $0x7c] sm:$0xf] %vm2105, %v2072
      %v2139 = vrot.slane %v589, 5
      %v2140 = vrot.slane %v2139, 4
      %v2141 = vrot.slane %v590, 5
      %v2142 = vsel %vm1191, %v2140, %v2141
      %v2143 = vrot.slane %v2141, 4
      %v2144 = vrot.slane %v591, 5
      %v2145 = vsel %vm1191, %v2143, %v2144
      %2146 = vrot.lane.b32.xlu0 %v1209, 32
      %v2147 = vpop.permute.xlu0 %2146
      %2148 = vrot.lane.b32.xlu0 %v1212, 32
      %v2149 = vpop.permute.xlu0 %2148
      %2150 = vrot.lane.b32.xlu0 %v1216, 32
      %v2151 = vpop.permute.xlu0 %2150
      %2152 = vrot.lane.b32.xlu0 %v1219, 32
      %v2153 = vpop.permute.xlu0 %2152
      %2154 = vrot.lane.b32.xlu0 %v1223, 32
      %v2155 = vpop.permute.xlu0 %2154
      %2156 = vrot.lane.b32.xlu0 %v1226, 32
      %v2157 = vpop.permute.xlu0 %2156
      %2158 = vrot.lane.b32.xlu0 %v1230, 32
      %v2159 = vpop.permute.xlu0 %2158
      %2160 = vrot.lane.b32.xlu0 %v1233, 32
      %v2161 = vpop.permute.xlu0 %2160
      %2162 = vrot.lane.b32.xlu0 %v1237, 32
      %v2163 = vpop.permute.xlu0 %2162
      %2164 = vrot.lane.b32.xlu0 %v1240, 32
      %v2165 = vpop.permute.xlu0 %2164
      %2166 = vrot.lane.b32.xlu0 %v1244, 32
      %v2167 = vpop.permute.xlu0 %2166
      %2168 = vrot.lane.b32.xlu0 %v1247, 32
      %v2169 = vpop.permute.xlu0 %2168
      %2170 = vrot.lane.b32.xlu0 %v1251, 32
      %v2171 = vpop.permute.xlu0 %2170
      %2172 = vrot.lane.b32.xlu0 %v1254, 32
      %v2173 = vpop.permute.xlu0 %2172
      %2174 = vrot.lane.b32.xlu0 %v1258, 32
      %v2175 = vpop.permute.xlu0 %2174
      %2176 = vrot.lane.b32.xlu0 %v1261, 32
      %v2177 = vpop.permute.xlu0 %2176
      %2178 = vrot.lane.b32.xlu0 %v1265, 32
      %v2179 = vpop.permute.xlu0 %2178
      %2180 = vrot.lane.b32.xlu0 %v1268, 32
      %v2181 = vpop.permute.xlu0 %2180
      %2182 = vrot.lane.b32.xlu0 %v1272, 32
      %v2183 = vpop.permute.xlu0 %2182
      %2184 = vrot.lane.b32.xlu0 %v1275, 32
      %v2185 = vpop.permute.xlu0 %2184
      %2186 = vrot.lane.b32.xlu0 %v1279, 32
      %v2187 = vpop.permute.xlu0 %2186
      %2188 = vrot.lane.b32.xlu0 %v1282, 32
      %v2189 = vpop.permute.xlu0 %2188
      %2190 = vrot.lane.b32.xlu0 %v1286, 32
      %v2191 = vpop.permute.xlu0 %2190
      %2192 = vrot.lane.b32.xlu0 %v1289, 32
      %v2193 = vpop.permute.xlu0 %2192
      %2194 = vrot.lane.b32.xlu0 %v1293, 32
      %v2195 = vpop.permute.xlu0 %2194
      %2196 = vrot.lane.b32.xlu0 %v1296, 32
      %v2197 = vpop.permute.xlu0 %2196
      %2198 = vrot.lane.b32.xlu0 %v1300, 32
      %v2199 = vpop.permute.xlu0 %2198
      %2200 = vrot.lane.b32.xlu0 %v1303, 32
      %v2201 = vpop.permute.xlu0 %2200
      %2202 = vrot.lane.b32.xlu0 %v1721, 32
      %v2203 = vpop.permute.xlu0 %2202
      %2204 = vrot.lane.b32.xlu0 %v1724, 32
      %v2205 = vpop.permute.xlu0 %2204
      %2206 = vrot.lane.b32.xlu0 %v2142, 32
      %v2207 = vpop.permute.xlu0 %2206
      %2208 = vrot.lane.b32.xlu0 %v2145, 32
      %v2209 = vpop.permute.xlu0 %2208
      %vm2242 = vcmask 290048
      %2243 = vst.msk [vmem:[#allocation3] sm:$0xf] %vm2242, %v2147
      %2244 = vst.msk [vmem:[#allocation3 + $0x4] sm:$0xf] %vm2242, %v2149
      %2245 = vst.msk [vmem:[#allocation3 + $0x8] sm:$0xf] %vm2242, %v2151
      %2246 = vst.msk [vmem:[#allocation3 + $0xc] sm:$0xf] %vm2242, %v2153
      %2247 = vst.msk [vmem:[#allocation3 + $0x10] sm:$0xf] %vm2242, %v2155
      %2248 = vst.msk [vmem:[#allocation3 + $0x14] sm:$0xf] %vm2242, %v2157
      %2249 = vst.msk [vmem:[#allocation3 + $0x18] sm:$0xf] %vm2242, %v2159
      %2250 = vst.msk [vmem:[#allocation3 + $0x1c] sm:$0xf] %vm2242, %v2161
      %2251 = vst.msk [vmem:[#allocation3 + $0x20] sm:$0xf] %vm2242, %v2163
      %2252 = vst.msk [vmem:[#allocation3 + $0x24] sm:$0xf] %vm2242, %v2165
      %2253 = vst.msk [vmem:[#allocation3 + $0x28] sm:$0xf] %vm2242, %v2167
      %2254 = vst.msk [vmem:[#allocation3 + $0x2c] sm:$0xf] %vm2242, %v2169
      %2255 = vst.msk [vmem:[#allocation3 + $0x30] sm:$0xf] %vm2242, %v2171
      %2256 = vst.msk [vmem:[#allocation3 + $0x34] sm:$0xf] %vm2242, %v2173
      %2257 = vst.msk [vmem:[#allocation3 + $0x38] sm:$0xf] %vm2242, %v2175
      %2258 = vst.msk [vmem:[#allocation3 + $0x3c] sm:$0xf] %vm2242, %v2177
      %2259 = vst.msk [vmem:[#allocation3 + $0x40] sm:$0xf] %vm2242, %v2179
      %2260 = vst.msk [vmem:[#allocation3 + $0x44] sm:$0xf] %vm2242, %v2181
      %2261 = vst.msk [vmem:[#allocation3 + $0x48] sm:$0xf] %vm2242, %v2183
      %2262 = vst.msk [vmem:[#allocation3 + $0x4c] sm:$0xf] %vm2242, %v2185
      %2263 = vst.msk [vmem:[#allocation3 + $0x50] sm:$0xf] %vm2242, %v2187
      %2264 = vst.msk [vmem:[#allocation3 + $0x54] sm:$0xf] %vm2242, %v2189
      %2265 = vst.msk [vmem:[#allocation3 + $0x58] sm:$0xf] %vm2242, %v2191
      %2266 = vst.msk [vmem:[#allocation3 + $0x5c] sm:$0xf] %vm2242, %v2193
      %2267 = vst.msk [vmem:[#allocation3 + $0x60] sm:$0xf] %vm2242, %v2195
      %2268 = vst.msk [vmem:[#allocation3 + $0x64] sm:$0xf] %vm2242, %v2197
      %2269 = vst.msk [vmem:[#allocation3 + $0x68] sm:$0xf] %vm2242, %v2199
      %2270 = vst.msk [vmem:[#allocation3 + $0x6c] sm:$0xf] %vm2242, %v2201
      %2271 = vst.msk [vmem:[#allocation3 + $0x70] sm:$0xf] %vm2242, %v2203
      %2272 = vst.msk [vmem:[#allocation3 + $0x74] sm:$0xf] %vm2242, %v2205
      %2273 = vst.msk [vmem:[#allocation3 + $0x78] sm:$0xf] %vm2242, %v2207
      %2274 = vst.msk [vmem:[#allocation3 + $0x7c] sm:$0xf] %vm2242, %v2209
      %v2275 = vld [vmem:[#allocation3] sm:$0xf]
      %v2276 = vld [vmem:[#allocation3 + $0x4] sm:$0xf]
      %v2277 = vld [vmem:[#allocation3 + $0x8] sm:$0xf]
      %v2278 = vld [vmem:[#allocation3 + $0xc] sm:$0xf]
      %v2279 = vld [vmem:[#allocation3 + $0x10] sm:$0xf]
      %v2280 = vld [vmem:[#allocation3 + $0x14] sm:$0xf]
      %v2281 = vld [vmem:[#allocation3 + $0x18] sm:$0xf]
      %v2282 = vld [vmem:[#allocation3 + $0x1c] sm:$0xf]
      %v2283 = vld [vmem:[#allocation3 + $0x20] sm:$0xf]
      %v2284 = vld [vmem:[#allocation3 + $0x24] sm:$0xf]
      %v2285 = vld [vmem:[#allocation3 + $0x28] sm:$0xf]
      %v2286 = vld [vmem:[#allocation3 + $0x2c] sm:$0xf]
      %v2287 = vld [vmem:[#allocation3 + $0x30] sm:$0xf]
      %v2288 = vld [vmem:[#allocation3 + $0x34] sm:$0xf]
      %v2289 = vld [vmem:[#allocation3 + $0x38] sm:$0xf]
      %v2290 = vld [vmem:[#allocation3 + $0x3c] sm:$0xf]
      %v2291 = vld [vmem:[#allocation3 + $0x40] sm:$0xf]
      %v2292 = vld [vmem:[#allocation3 + $0x44] sm:$0xf]
      %v2293 = vld [vmem:[#allocation3 + $0x48] sm:$0xf]
      %v2294 = vld [vmem:[#allocation3 + $0x4c] sm:$0xf]
      %v2295 = vld [vmem:[#allocation3 + $0x50] sm:$0xf]
      %v2296 = vld [vmem:[#allocation3 + $0x54] sm:$0xf]
      %v2297 = vld [vmem:[#allocation3 + $0x58] sm:$0xf]
      %v2298 = vld [vmem:[#allocation3 + $0x5c] sm:$0xf]
      %v2299 = vld [vmem:[#allocation3 + $0x60] sm:$0xf]
      %v2300 = vld [vmem:[#allocation3 + $0x64] sm:$0xf]
      %v2301 = vld [vmem:[#allocation3 + $0x68] sm:$0xf]
      %v2302 = vld [vmem:[#allocation3 + $0x6c] sm:$0xf]
      %v2303 = vld [vmem:[#allocation3 + $0x70] sm:$0xf]
      %v2304 = vld [vmem:[#allocation3 + $0x74] sm:$0xf]
      %v2305 = vld [vmem:[#allocation3 + $0x78] sm:$0xf]
      %v2306 = vld [vmem:[#allocation3 + $0x7c] sm:$0xf]
      %v2307 = vld [vmem:[%s3] sm:$0xf]
      %v2308 = vld [vmem:[%s3 + $0x4] sm:$0xf]
      %v2309 = vld [vmem:[%s3 + $0x8] sm:$0xf]
      %v2310 = vld [vmem:[%s3 + $0xc] sm:$0xf]
      %v2311 = vld [vmem:[%s3 + $0x10] sm:$0x3]
      %v2344 = vunpack.c.l.b16 %v2275
      %v2345 = vunpack.c.l.b16 %v2276
      %v2346 = vunpack.c.l.b16 %v2277
      %v2347 = vunpack.c.l.b16 %v2278
      %v2348 = vunpack.c.l.b16 %v2279
      %v2349 = vunpack.c.l.b16 %v2280
      %v2350 = vunpack.c.l.b16 %v2281
      %v2351 = vunpack.c.l.b16 %v2282
      %v2352 = vunpack.c.l.b16 %v2283
      %v2353 = vunpack.c.l.b16 %v2284
      %v2354 = vunpack.c.l.b16 %v2285
      %v2355 = vunpack.c.l.b16 %v2286
      %v2356 = vunpack.c.l.b16 %v2287
      %v2357 = vunpack.c.l.b16 %v2288
      %v2358 = vunpack.c.l.b16 %v2289
      %v2359 = vunpack.c.l.b16 %v2290
      %v2360 = vunpack.c.l.b16 %v2291
      %v2361 = vunpack.c.l.b16 %v2292
      %v2362 = vunpack.c.l.b16 %v2293
      %v2363 = vunpack.c.l.b16 %v2294
      %v2364 = vunpack.c.l.b16 %v2295
      %v2365 = vunpack.c.l.b16 %v2296
      %v2366 = vunpack.c.l.b16 %v2297
      %v2367 = vunpack.c.l.b16 %v2298
      %v2368 = vunpack.c.l.b16 %v2299
      %v2369 = vunpack.c.l.b16 %v2300
      %v2370 = vunpack.c.l.b16 %v2301
      %v2371 = vunpack.c.l.b16 %v2302
      %v2372 = vunpack.c.l.b16 %v2303
      %v2373 = vunpack.c.l.b16 %v2304
      %v2374 = vunpack.c.l.b16 %v2305
      %v2375 = vunpack.c.l.b16 %v2306
      %v2376 = vpack.c.b16 %v2345, %v2344
      %v2377 = vpack.c.b16 %v2347, %v2346
      %v2378 = vpack.c.b16 %v2349, %v2348
      %v2379 = vpack.c.b16 %v2351, %v2350
      %v2380 = vpack.c.b16 %v2353, %v2352
      %v2381 = vpack.c.b16 %v2355, %v2354
      %v2382 = vpack.c.b16 %v2357, %v2356
      %v2383 = vpack.c.b16 %v2359, %v2358
      %v2384 = vpack.c.b16 %v2361, %v2360
      %v2385 = vpack.c.b16 %v2363, %v2362
      %v2386 = vpack.c.b16 %v2365, %v2364
      %v2387 = vpack.c.b16 %v2367, %v2366
      %v2388 = vpack.c.b16 %v2369, %v2368
      %v2389 = vpack.c.b16 %v2371, %v2370
      %v2390 = vpack.c.b16 %v2373, %v2372
      %v2391 = vpack.c.b16 %v2375, %v2374
      %v2397 = vunpack.c.l.b16 %v2307
      %v2398 = vunpack.c.l.b16 %v2308
      %v2399 = vunpack.c.l.b16 %v2309
      %v2400 = vunpack.c.l.b16 %v2310
      %v2401 = vunpack.c.l.b16 %v2311
      %v2402 = vpack.c.b16 %v2398, %v2397
      %v2403 = vpack.c.b16 %v2400, %v2399
      %v2404 = vpack.c.b16 %v2401, %v2401
      %vm2407 = vcmask 293888
      %v2409 = vsel %vm2407, %v2376, 0
      %v2412 = vsel %vm2407, %v2377, 0
      %v2415 = vsel %vm2407, %v2378, 0
      %v2418 = vsel %vm2407, %v2379, 0
      %v2421 = vsel %vm2407, %v2380, 0
      %v2424 = vsel %vm2407, %v2381, 0
      %v2427 = vsel %vm2407, %v2382, 0
      %v2430 = vsel %vm2407, %v2383, 0
      %v2433 = vsel %vm2407, %v2384, 0
      %v2436 = vsel %vm2407, %v2385, 0
      %v2439 = vsel %vm2407, %v2386, 0
      %v2442 = vsel %vm2407, %v2387, 0
      %v2445 = vsel %vm2407, %v2388, 0
      %v2448 = vsel %vm2407, %v2389, 0
      %v2451 = vsel %vm2407, %v2390, 0
      %v2454 = vsel %vm2407, %v2391, 0
      %vm2456 = vcmask 1041408
      %v2458 = vsel %vm2456, %v2404, 0
      %2460 = vmatpush.bf16.msra.mxu0 0
      %2461 = vmatpush.bf16.msra.mxu0 0
      %2462 = vmatpush.bf16.msra.mxu0 0
      %2463 = vmatpush.bf16.msra.mxu0 0
      %2464 = vmatpush.bf16.msra.mxu0 0
      %2465 = vmatpush.bf16.msra.mxu0 %v2458
      %2466 = vmatpush.bf16.msra.mxu0 %v2403
      %2467 = vmatpush.bf16.msra.mxu0 %v2402
      %2468 = vmatmul.bf16.gmra.mxu0 %v2409
      %v2469 = vpop.f32.mrf.mxu0
      %v2470 = vadd.f32 0.0, %v2469
      %v2471 = vpop.f32.mrf.mxu0
      %v2472 = vadd.f32 0.0, %v2471
      %2473 = vmatmul.bf16.gmra.mxu0 %v2412
      %v2474 = vpop.f32.mrf.mxu0
      %v2475 = vadd.f32 0.0, %v2474
      %v2476 = vpop.f32.mrf.mxu0
      %v2477 = vadd.f32 0.0, %v2476
      %2478 = vmatmul.bf16.gmra.mxu0 %v2415
      %v2479 = vpop.f32.mrf.mxu0
      %v2480 = vadd.f32 0.0, %v2479
      %v2481 = vpop.f32.mrf.mxu0
      %v2482 = vadd.f32 0.0, %v2481
      %2483 = vmatmul.bf16.gmra.mxu0 %v2418
      %v2484 = vpop.f32.mrf.mxu0
      %v2485 = vadd.f32 0.0, %v2484
      %v2486 = vpop.f32.mrf.mxu0
      %v2487 = vadd.f32 0.0, %v2486
      %2488 = vmatmul.bf16.gmra.mxu0 %v2421
      %v2489 = vpop.f32.mrf.mxu0
      %v2490 = vadd.f32 0.0, %v2489
      %v2491 = vpop.f32.mrf.mxu0
      %v2492 = vadd.f32 0.0, %v2491
      %2493 = vmatmul.bf16.gmra.mxu0 %v2424
      %v2494 = vpop.f32.mrf.mxu0
      %v2495 = vadd.f32 0.0, %v2494
      %v2496 = vpop.f32.mrf.mxu0
      %v2497 = vadd.f32 0.0, %v2496
      %2498 = vmatmul.bf16.gmra.mxu0 %v2427
      %v2499 = vpop.f32.mrf.mxu0
      %v2500 = vadd.f32 0.0, %v2499
      %v2501 = vpop.f32.mrf.mxu0
      %v2502 = vadd.f32 0.0, %v2501
      %2503 = vmatmul.bf16.gmra.mxu0 %v2430
      %v2504 = vpop.f32.mrf.mxu0
      %v2505 = vadd.f32 0.0, %v2504
      %v2506 = vpop.f32.mrf.mxu0
      %v2507 = vadd.f32 0.0, %v2506
      %2508 = vmatmul.bf16.gmra.mxu0 %v2433
      %v2509 = vpop.f32.mrf.mxu0
      %v2510 = vadd.f32 0.0, %v2509
      %v2511 = vpop.f32.mrf.mxu0
      %v2512 = vadd.f32 0.0, %v2511
      %2513 = vmatmul.bf16.gmra.mxu0 %v2436
      %v2514 = vpop.f32.mrf.mxu0
      %v2515 = vadd.f32 0.0, %v2514
      %v2516 = vpop.f32.mrf.mxu0
      %v2517 = vadd.f32 0.0, %v2516
      %2518 = vmatmul.bf16.gmra.mxu0 %v2439
      %v2519 = vpop.f32.mrf.mxu0
      %v2520 = vadd.f32 0.0, %v2519
      %v2521 = vpop.f32.mrf.mxu0
      %v2522 = vadd.f32 0.0, %v2521
      %2523 = vmatmul.bf16.gmra.mxu0 %v2442
      %v2524 = vpop.f32.mrf.mxu0
      %v2525 = vadd.f32 0.0, %v2524
      %v2526 = vpop.f32.mrf.mxu0
      %v2527 = vadd.f32 0.0, %v2526
      %2528 = vmatmul.bf16.gmra.mxu0 %v2445
      %v2529 = vpop.f32.mrf.mxu0
      %v2530 = vadd.f32 0.0, %v2529
      %v2531 = vpop.f32.mrf.mxu0
      %v2532 = vadd.f32 0.0, %v2531
      %2533 = vmatmul.bf16.gmra.mxu0 %v2448
      %v2534 = vpop.f32.mrf.mxu0
      %v2535 = vadd.f32 0.0, %v2534
      %v2536 = vpop.f32.mrf.mxu0
      %v2537 = vadd.f32 0.0, %v2536
      %2538 = vmatmul.bf16.gmra.mxu0 %v2451
      %v2539 = vpop.f32.mrf.mxu0
      %v2540 = vadd.f32 0.0, %v2539
      %v2541 = vpop.f32.mrf.mxu0
      %v2542 = vadd.f32 0.0, %v2541
      %2543 = vmatmul.bf16.gmra.mxu0 %v2454
      %v2544 = vpop.f32.mrf.mxu0
      %v2545 = vadd.f32 0.0, %v2544
      %v2546 = vpop.f32.mrf.mxu0
      %v2547 = vadd.f32 0.0, %v2546
      %2548 = vdwg.mxu0
      %v2549 = vmax.f32 %v2470, 0.0
      %v2550 = vmax.f32 %v2472, 0.0
      %v2551 = vmax.f32 %v2475, 0.0
      %v2552 = vmax.f32 %v2477, 0.0
      %v2553 = vmax.f32 %v2480, 0.0
      %v2554 = vmax.f32 %v2482, 0.0
      %v2555 = vmax.f32 %v2485, 0.0
      %v2556 = vmax.f32 %v2487, 0.0
      %v2557 = vmax.f32 %v2490, 0.0
      %v2558 = vmax.f32 %v2492, 0.0
      %v2559 = vmax.f32 %v2495, 0.0
      %v2560 = vmax.f32 %v2497, 0.0
      %v2561 = vmax.f32 %v2500, 0.0
      %v2562 = vmax.f32 %v2502, 0.0
      %v2563 = vmax.f32 %v2505, 0.0
      %v2564 = vmax.f32 %v2507, 0.0
      %v2565 = vmax.f32 %v2510, 0.0
      %v2566 = vmax.f32 %v2512, 0.0
      %v2567 = vmax.f32 %v2515, 0.0
      %v2568 = vmax.f32 %v2517, 0.0
      %v2569 = vmax.f32 %v2520, 0.0
      %v2570 = vmax.f32 %v2522, 0.0
      %v2571 = vmax.f32 %v2525, 0.0
      %v2572 = vmax.f32 %v2527, 0.0
      %v2573 = vmax.f32 %v2530, 0.0
      %v2574 = vmax.f32 %v2532, 0.0
      %v2575 = vmax.f32 %v2535, 0.0
      %v2576 = vmax.f32 %v2537, 0.0
      %v2577 = vmax.f32 %v2540, 0.0
      %v2578 = vmax.f32 %v2542, 0.0
      %v2579 = vmax.f32 %v2545, 0.0
      %v2580 = vmax.f32 %v2547, 0.0
      %v2581 = vpack.c.bf16 %v2550, %v2549
      %v2582 = vpack.c.bf16 %v2552, %v2551
      %v2583 = vpack.c.bf16 %v2554, %v2553
      %v2584 = vpack.c.bf16 %v2556, %v2555
      %v2585 = vpack.c.bf16 %v2558, %v2557
      %v2586 = vpack.c.bf16 %v2560, %v2559
      %v2587 = vpack.c.bf16 %v2562, %v2561
      %v2588 = vpack.c.bf16 %v2564, %v2563
      %v2589 = vpack.c.bf16 %v2566, %v2565
      %v2590 = vpack.c.bf16 %v2568, %v2567
      %v2591 = vpack.c.bf16 %v2570, %v2569
      %v2592 = vpack.c.bf16 %v2572, %v2571
      %v2593 = vpack.c.bf16 %v2574, %v2573
      %v2594 = vpack.c.bf16 %v2576, %v2575
      %v2595 = vpack.c.bf16 %v2578, %v2577
      %v2596 = vpack.c.bf16 %v2580, %v2579
      %v2597 = vld [vmem:[%s4] sm:$0xf]
      %v2598 = vld [vmem:[%s4 + $0x4] sm:$0xf]
      %v2599 = vld [vmem:[%s4 + $0x8] sm:$0xf]
      %v2600 = vld [vmem:[%s4 + $0xc] sm:$0xf]
      %v2601 = vld [vmem:[%s4 + $0x10] sm:$0xf]
      %v2602 = vld [vmem:[%s4 + $0x14] sm:$0xf]
      %v2603 = vld [vmem:[%s4 + $0x18] sm:$0xf]
      %v2604 = vld [vmem:[%s4 + $0x1c] sm:$0xf]
      %v2605 = vld [vmem:[%s4 + $0x20] sm:$0xf]
      %v2606 = vld [vmem:[%s4 + $0x24] sm:$0xf]
      %v2607 = vld [vmem:[%s4 + $0x28] sm:$0xf]
      %v2608 = vld [vmem:[%s4 + $0x2c] sm:$0xf]
      %v2609 = vld [vmem:[%s4 + $0x30] sm:$0xf]
      %v2610 = vld [vmem:[%s4 + $0x34] sm:$0xf]
      %v2611 = vld [vmem:[%s4 + $0x38] sm:$0xf]
      %v2612 = vld [vmem:[%s4 + $0x3c] sm:$0xf]
      %v2629 = vunpack.c.l.b16 %v2597
      %v2630 = vunpack.c.l.b16 %v2598
      %v2631 = vunpack.c.l.b16 %v2599
      %v2632 = vunpack.c.l.b16 %v2600
      %v2633 = vunpack.c.l.b16 %v2601
      %v2634 = vunpack.c.l.b16 %v2602
      %v2635 = vunpack.c.l.b16 %v2603
      %v2636 = vunpack.c.l.b16 %v2604
      %v2637 = vunpack.c.l.b16 %v2605
      %v2638 = vunpack.c.l.b16 %v2606
      %v2639 = vunpack.c.l.b16 %v2607
      %v2640 = vunpack.c.l.b16 %v2608
      %v2641 = vunpack.c.l.b16 %v2609
      %v2642 = vunpack.c.l.b16 %v2610
      %v2643 = vunpack.c.l.b16 %v2611
      %v2644 = vunpack.c.l.b16 %v2612
      %v2645 = vpack.c.b16 %v2630, %v2629
      %v2646 = vpack.c.b16 %v2632, %v2631
      %v2647 = vpack.c.b16 %v2634, %v2633
      %v2648 = vpack.c.b16 %v2636, %v2635
      %v2649 = vpack.c.b16 %v2638, %v2637
      %v2650 = vpack.c.b16 %v2640, %v2639
      %v2651 = vpack.c.b16 %v2642, %v2641
      %v2652 = vpack.c.b16 %v2644, %v2643
      %2661 = vmatpush.bf16.msra.mxu0 %v2652
      %2662 = vmatpush.bf16.msra.mxu0 %v2651
      %2663 = vmatpush.bf16.msra.mxu0 %v2650
      %2664 = vmatpush.bf16.msra.mxu0 %v2649
      %2665 = vmatpush.bf16.msra.mxu0 %v2648
      %2666 = vmatpush.bf16.msra.mxu0 %v2647
      %2667 = vmatpush.bf16.msra.mxu0 %v2646
      %2668 = vmatpush.bf16.msra.mxu0 %v2645
      %2669 = vmatmul.bf16.gmra.mxu0 %v2581
      %v2670 = vpop.f32.mrf.mxu0
      %v2671 = vadd.f32 0.0, %v2670
      %v2672 = vpop.f32.mrf.mxu0
      %v2673 = vadd.f32 0.0, %v2672
      %2674 = vmatmul.bf16.gmra.mxu0 %v2582
      %v2675 = vpop.f32.mrf.mxu0
      %v2676 = vadd.f32 0.0, %v2675
      %v2677 = vpop.f32.mrf.mxu0
      %v2678 = vadd.f32 0.0, %v2677
      %2679 = vmatmul.bf16.gmra.mxu0 %v2583
      %v2680 = vpop.f32.mrf.mxu0
      %v2681 = vadd.f32 0.0, %v2680
      %v2682 = vpop.f32.mrf.mxu0
      %v2683 = vadd.f32 0.0, %v2682
      %2684 = vmatmul.bf16.gmra.mxu0 %v2584
      %v2685 = vpop.f32.mrf.mxu0
      %v2686 = vadd.f32 0.0, %v2685
      %v2687 = vpop.f32.mrf.mxu0
      %v2688 = vadd.f32 0.0, %v2687
      %2689 = vmatmul.bf16.gmra.mxu0 %v2585
      %v2690 = vpop.f32.mrf.mxu0
      %v2691 = vadd.f32 0.0, %v2690
      %v2692 = vpop.f32.mrf.mxu0
      %v2693 = vadd.f32 0.0, %v2692
      %2694 = vmatmul.bf16.gmra.mxu0 %v2586
      %v2695 = vpop.f32.mrf.mxu0
      %v2696 = vadd.f32 0.0, %v2695
      %v2697 = vpop.f32.mrf.mxu0
      %v2698 = vadd.f32 0.0, %v2697
      %2699 = vmatmul.bf16.gmra.mxu0 %v2587
      %v2700 = vpop.f32.mrf.mxu0
      %v2701 = vadd.f32 0.0, %v2700
      %v2702 = vpop.f32.mrf.mxu0
      %v2703 = vadd.f32 0.0, %v2702
      %2704 = vmatmul.bf16.gmra.mxu0 %v2588
      %v2705 = vpop.f32.mrf.mxu0
      %v2706 = vadd.f32 0.0, %v2705
      %v2707 = vpop.f32.mrf.mxu0
      %v2708 = vadd.f32 0.0, %v2707
      %2709 = vmatmul.bf16.gmra.mxu0 %v2589
      %v2710 = vpop.f32.mrf.mxu0
      %v2711 = vadd.f32 0.0, %v2710
      %v2712 = vpop.f32.mrf.mxu0
      %v2713 = vadd.f32 0.0, %v2712
      %2714 = vmatmul.bf16.gmra.mxu0 %v2590
      %v2715 = vpop.f32.mrf.mxu0
      %v2716 = vadd.f32 0.0, %v2715
      %v2717 = vpop.f32.mrf.mxu0
      %v2718 = vadd.f32 0.0, %v2717
      %2719 = vmatmul.bf16.gmra.mxu0 %v2591
      %v2720 = vpop.f32.mrf.mxu0
      %v2721 = vadd.f32 0.0, %v2720
      %v2722 = vpop.f32.mrf.mxu0
      %v2723 = vadd.f32 0.0, %v2722
      %2724 = vmatmul.bf16.gmra.mxu0 %v2592
      %v2725 = vpop.f32.mrf.mxu0
      %v2726 = vadd.f32 0.0, %v2725
      %v2727 = vpop.f32.mrf.mxu0
      %v2728 = vadd.f32 0.0, %v2727
      %2729 = vmatmul.bf16.gmra.mxu0 %v2593
      %v2730 = vpop.f32.mrf.mxu0
      %v2731 = vadd.f32 0.0, %v2730
      %v2732 = vpop.f32.mrf.mxu0
      %v2733 = vadd.f32 0.0, %v2732
      %2734 = vmatmul.bf16.gmra.mxu0 %v2594
      %v2735 = vpop.f32.mrf.mxu0
      %v2736 = vadd.f32 0.0, %v2735
      %v2737 = vpop.f32.mrf.mxu0
      %v2738 = vadd.f32 0.0, %v2737
      %2739 = vmatmul.bf16.gmra.mxu0 %v2595
      %v2740 = vpop.f32.mrf.mxu0
      %v2741 = vadd.f32 0.0, %v2740
      %v2742 = vpop.f32.mrf.mxu0
      %v2743 = vadd.f32 0.0, %v2742
      %2744 = vmatmul.bf16.gmra.mxu0 %v2596
      %v2745 = vpop.f32.mrf.mxu0
      %v2746 = vadd.f32 0.0, %v2745
      %v2747 = vpop.f32.mrf.mxu0
      %v2748 = vadd.f32 0.0, %v2747
      %2749 = vdwg.mxu0
      %v2750 = vld [vmem:[%s306] sm:$0xff]
      %v2751 = vld [vmem:[%s306 + $0x8] sm:$0xff]
      %v2752 = vld [vmem:[%s306 + $0x10] sm:$0xff]
      %v2753 = vld [vmem:[%s306 + $0x18] sm:$0xff]
      %v2754 = vld [vmem:[%s306 + $0x20] sm:$0xff]
      %v2755 = vld [vmem:[%s306 + $0x28] sm:$0xff]
      %v2756 = vld [vmem:[%s306 + $0x30] sm:$0xff]
      %v2757 = vld [vmem:[%s306 + $0x38] sm:$0xff]
      %v2758 = vld [vmem:[%s306 + $0x40] sm:$0xff]
      %v2759 = vld [vmem:[%s306 + $0x48] sm:$0xff]
      %v2760 = vld [vmem:[%s306 + $0x50] sm:$0xff]
      %v2761 = vld [vmem:[%s306 + $0x58] sm:$0xff]
      %v2762 = vld [vmem:[%s306 + $0x60] sm:$0xff]
      %v2763 = vld [vmem:[%s306 + $0x68] sm:$0xff]
      %v2764 = vld [vmem:[%s306 + $0x70] sm:$0xff]
      %v2765 = vld [vmem:[%s306 + $0x78] sm:$0xff]
      %v2766 = vld [vmem:[%s306 + $0x80] sm:$0xff]
      %v2767 = vld [vmem:[%s306 + $0x88] sm:$0xff]
      %v2768 = vld [vmem:[%s306 + $0x90] sm:$0xff]
      %v2769 = vld [vmem:[%s306 + $0x98] sm:$0xff]
      %v2770 = vld [vmem:[%s306 + $0xa0] sm:$0xff]
      %v2771 = vld [vmem:[%s306 + $0xa8] sm:$0xff]
      %v2772 = vld [vmem:[%s306 + $0xb0] sm:$0xff]
      %v2773 = vld [vmem:[%s306 + $0xb8] sm:$0xff]
      %v2774 = vld [vmem:[%s306 + $0xc0] sm:$0xff]
      %v2775 = vld [vmem:[%s306 + $0xc8] sm:$0xff]
      %v2776 = vld [vmem:[%s306 + $0xd0] sm:$0xff]
      %v2777 = vld [vmem:[%s306 + $0xd8] sm:$0xff]
      %v2778 = vld [vmem:[%s306 + $0xe0] sm:$0xff]
      %v2779 = vld [vmem:[%s306 + $0xe8] sm:$0xff]
      %v2780 = vld [vmem:[%s306 + $0xf0] sm:$0xff]
      %v2781 = vld [vmem:[%s306 + $0xf8] sm:$0xff]
      %v2782 = vadd.f32 %v2750, %v2671
      %v2783 = vadd.f32 %v2751, %v2673
      %v2784 = vadd.f32 %v2752, %v2676
      %v2785 = vadd.f32 %v2753, %v2678
      %v2786 = vadd.f32 %v2754, %v2681
      %v2787 = vadd.f32 %v2755, %v2683
      %v2788 = vadd.f32 %v2756, %v2686
      %v2789 = vadd.f32 %v2757, %v2688
      %v2790 = vadd.f32 %v2758, %v2691
      %v2791 = vadd.f32 %v2759, %v2693
      %v2792 = vadd.f32 %v2760, %v2696
      %v2793 = vadd.f32 %v2761, %v2698
      %v2794 = vadd.f32 %v2762, %v2701
      %v2795 = vadd.f32 %v2763, %v2703
      %v2796 = vadd.f32 %v2764, %v2706
      %v2797 = vadd.f32 %v2765, %v2708
      %v2798 = vadd.f32 %v2766, %v2711
      %v2799 = vadd.f32 %v2767, %v2713
      %v2800 = vadd.f32 %v2768, %v2716
      %v2801 = vadd.f32 %v2769, %v2718
      %v2802 = vadd.f32 %v2770, %v2721
      %v2803 = vadd.f32 %v2771, %v2723
      %v2804 = vadd.f32 %v2772, %v2726
      %v2805 = vadd.f32 %v2773, %v2728
      %v2806 = vadd.f32 %v2774, %v2731
      %v2807 = vadd.f32 %v2775, %v2733
      %v2808 = vadd.f32 %v2776, %v2736
      %v2809 = vadd.f32 %v2777, %v2738
      %v2810 = vadd.f32 %v2778, %v2741
      %v2811 = vadd.f32 %v2779, %v2743
      %v2812 = vadd.f32 %v2780, %v2746
      %v2813 = vadd.f32 %v2781, %v2748
      %2814 = vst.msk [vmem:[%s335] sm:$0xff] %vm410, %v2782
      %2815 = vst.msk [vmem:[%s335 + $0x8] sm:$0xff] %vm410, %v2783
      %2816 = vst.msk [vmem:[%s335 + $0x10] sm:$0xff] %vm410, %v2784
      %2817 = vst.msk [vmem:[%s335 + $0x18] sm:$0xff] %vm410, %v2785
      %2818 = vst.msk [vmem:[%s335 + $0x20] sm:$0xff] %vm410, %v2786
      %2819 = vst.msk [vmem:[%s335 + $0x28] sm:$0xff] %vm410, %v2787
      %2820 = vst.msk [vmem:[%s335 + $0x30] sm:$0xff] %vm410, %v2788
      %2821 = vst.msk [vmem:[%s335 + $0x38] sm:$0xff] %vm410, %v2789
      %2822 = vst.msk [vmem:[%s335 + $0x40] sm:$0xff] %vm410, %v2790
      %2823 = vst.msk [vmem:[%s335 + $0x48] sm:$0xff] %vm410, %v2791
      %2824 = vst.msk [vmem:[%s335 + $0x50] sm:$0xff] %vm410, %v2792
      %2825 = vst.msk [vmem:[%s335 + $0x58] sm:$0xff] %vm410, %v2793
      %2826 = vst.msk [vmem:[%s335 + $0x60] sm:$0xff] %vm410, %v2794
      %2827 = vst.msk [vmem:[%s335 + $0x68] sm:$0xff] %vm410, %v2795
      %2828 = vst.msk [vmem:[%s335 + $0x70] sm:$0xff] %vm410, %v2796
      %2829 = vst.msk [vmem:[%s335 + $0x78] sm:$0xff] %vm410, %v2797
      %2830 = vst.msk [vmem:[%s335 + $0x80] sm:$0xff] %vm410, %v2798
      %2831 = vst.msk [vmem:[%s335 + $0x88] sm:$0xff] %vm410, %v2799
      %2832 = vst.msk [vmem:[%s335 + $0x90] sm:$0xff] %vm410, %v2800
      %2833 = vst.msk [vmem:[%s335 + $0x98] sm:$0xff] %vm410, %v2801
      %2834 = vst.msk [vmem:[%s335 + $0xa0] sm:$0xff] %vm410, %v2802
      %2835 = vst.msk [vmem:[%s335 + $0xa8] sm:$0xff] %vm410, %v2803
      %2836 = vst.msk [vmem:[%s335 + $0xb0] sm:$0xff] %vm410, %v2804
      %2837 = vst.msk [vmem:[%s335 + $0xb8] sm:$0xff] %vm410, %v2805
      %2838 = vst.msk [vmem:[%s335 + $0xc0] sm:$0xff] %vm410, %v2806
      %2839 = vst.msk [vmem:[%s335 + $0xc8] sm:$0xff] %vm410, %v2807
      %2840 = vst.msk [vmem:[%s335 + $0xd0] sm:$0xff] %vm410, %v2808
      %2841 = vst.msk [vmem:[%s335 + $0xd8] sm:$0xff] %vm410, %v2809
      %2842 = vst.msk [vmem:[%s335 + $0xe0] sm:$0xff] %vm410, %v2810
      %2843 = vst.msk [vmem:[%s335 + $0xe8] sm:$0xff] %vm410, %v2811
      %2844 = vst.msk [vmem:[%s335 + $0xf0] sm:$0xff] %vm410, %v2812
      %2845 = vst.msk [vmem:[%s335 + $0xf8] sm:$0xff] %vm410, %v2813
      %s2846 = smul.u32 16, %s21
      %p2847 = scmp.lt.s32.totalorder %s20, 1
      %s2848 = scalar_select %p2847, %s20, 1
      %p2849 = scmp.lt.s32.totalorder %s2846, 15
      %s2850 = scalar_select %p2849, %s2846, 15
      %s2851 = smul.addr %s2850, 2
      %s2852 = smul.addr %s2848, 32
      %s2853 = sadd.s32 %s2851, %s2852
      %s2854 = smul.addr %s2853, 8
      %s2855 = scalar_lea.vmem %s5, %s2854
      // Predicated region
      $region41: #{tpu_custom_call.1} parent=39 // pred_check
        %p2856 = pneg %p174
      $region42: #{tpu_custom_call.1} parent=39 // pred_check_branch
        %2858 = sbr.rel (%p2856) target = $region44
      $region43: #{tpu_custom_call.1} parent=39 // pred_region
        %s2859 = smul.u32 16, %s21
      $region44: #{tpu_custom_call.1} parent=39 // pred_fallthru
        _
    $region40: #{tpu_custom_call.1} parent=5 // pred_fallthru
      _
    %p2860 = scmp.le.s32.totalorder 2, %s11
    // Predicated region
    $region45: #{tpu_custom_call.1} parent=5 // pred_check
      %p2861 = pneg %p2860
    $region46: #{tpu_custom_call.1} parent=5 // pred_check_branch
      %2863 = sbr.rel (%p2861) target = $region48
    $region47: #{tpu_custom_call.1} parent=5 // pred_region
      %s2864 = ssub.s32 %s11, 2
      // Predicated region
      $region49: #{tpu_custom_call.1} parent=47 // pred_check
        %p2865 = pneg %p180
      $region50: #{tpu_custom_call.1} parent=47 // pred_check_branch
        %2867 = sbr.rel (%p2865) target = $region52
      $region51: #{tpu_custom_call.1} parent=47 // pred_region
        %s2868 = smul.u32 16, %s23
        %p2869 = scmp.lt.s32.totalorder %s22, 1
        %s2870 = scalar_select %p2869, %s22, 1
        %p2871 = scmp.lt.s32.totalorder %s2868, 15
        %s2872 = scalar_select %p2871, %s2868, 15
        %s2873 = smul.addr %s2872, 2
        %s2874 = smul.addr %s2870, 32
        %s2875 = sadd.s32 %s2873, %s2874
        %s2876 = smul.addr %s2875, 8
        %s2877 = scalar_lea.vmem %s5, %s2876
      $region52: #{tpu_custom_call.1} parent=47 // pred_fallthru
        _
    $region48: #{tpu_custom_call.1} parent=5 // pred_fallthru
      _
  $region6: #{tpu_custom_call.1} parent=0 // loop_footer
    %s15 = sadd.s32 1, %s11
  $region7: #{tpu_custom_call.1} parent=0 // loop_footer_branch
    %10 = sbr.rel target = $region3
  $region8: #{tpu_custom_call.1} parent=0 // loop_exit
    _

</llo_original>
